<compile_context>
chip_gen: v6e
topology: v6e:2x2x1
jax: 0.10.0
libtpu: 0.0.40
codegen_flags: <defaults>
</compile_context>

<pallas_src>
import functools

import jax
import jax.numpy as jnp
from jax import lax
from jax.experimental import pallas as pl
from jax.experimental.pallas import tpu as pltpu


# ----------------------------------------------------------------------------
# Kernel 1: duration predictor (conv/LN/ReLU x2 -> linear -> ReLU),
#           one batch element per grid step.
# ----------------------------------------------------------------------------
def _duration_kernel(x_ref, w1_ref, b1_ref, g1_ref, be1_ref,
                     w2_ref, b2_ref, g2_ref, be2_ref, wl_ref, bl_ref,
                     dur_ref):
    L = x_ref.shape[1]
    x_f32 = x_ref[0].astype(jnp.float32)                   # (L, D)

    # (L, 1) boundary masks, built once and shared by both conv layers.
    row = lax.broadcasted_iota(jnp.int32, (L, 1), 0)
    not_first = row != 0
    not_last = row != L - 1

    def conv3(h, w_flat_ref, b):
        # h: (L, C) f32; out[t] = W0 h[t-1] + W1 h[t] + W2 h[t+1] (zero padded)
        # expressed as one (L, 3C) x (3C, F) bf16 matmul with f32 accumulation.
        Lh = h.shape[0]
        hm1 = jnp.where(not_first, pltpu.roll(h, 1, 0), 0.0).astype(jnp.bfloat16)
        hp1 = jnp.where(not_last, pltpu.roll(h, Lh - 1, 0), 0.0).astype(jnp.bfloat16)
        h_cat = jnp.concatenate([hm1, h.astype(jnp.bfloat16), hp1], axis=-1)
        return jnp.dot(h_cat, w_flat_ref[...],
                       preferred_element_type=jnp.float32) + b

    def layernorm(h, g, b):
        # two-pass statistics in f32, eps = 1e-5 (PyTorch default)
        mu = jnp.mean(h, axis=-1, keepdims=True)
        d = h - mu
        var = jnp.mean(d * d, axis=-1, keepdims=True)
        return d * lax.rsqrt(var + 1e-5) * g + b

    h = conv3(x_f32, w1_ref, b1_ref[...])
    h = jnp.maximum(layernorm(h, g1_ref[...], be1_ref[...]), 0.0)
    # dropout_1: identity (eval mode)
    h = conv3(h, w2_ref, b2_ref[...])
    h = jnp.maximum(layernorm(h, g2_ref[...], be2_ref[...]), 0.0)
    # dropout_2: identity (eval mode)
    # Linear(F, 1) + ReLU on the VPU/XLU (an N=1 MXU matmul would waste the array)
    dur_col = jnp.sum(h * wl_ref[...], axis=-1, keepdims=True) + bl_ref[...]
    dur_ref[0] = jnp.maximum(dur_col, 0.0).astype(dur_ref.dtype)   # (L, 1)


# ----------------------------------------------------------------------------
# Kernel 2: length regulation (teacher-forced), one (batch, T-tile) per step.
#   alignment[t, j] = 1  iff  start[j] <= t < end[j]   (int32 compares)
#   out tile = align @ (x_hi + x_mid + x_lo)           (3 bf16 MXU passes,
#                                                        f32 accumulation,
#                                                        bit-exact row copies)
# ----------------------------------------------------------------------------
def _regulate_kernel(bounds_ref, xh_ref, xm_ref, xl_ref, out_ref):
    tT = out_ref.shape[1]
    L = xh_ref.shape[1]
    t0 = pl.program_id(1) * tT

    b2d = bounds_ref[0]                                      # (2, L) int32
    start = b2d[0:1, :]                                      # exclusive cumsum
    end = b2d[1:2, :]                                        # inclusive cumsum
    t_idx = t0 + lax.broadcasted_iota(jnp.int32, (tT, L), 0)
    align = ((t_idx >= start) & (t_idx < end)).astype(jnp.bfloat16)  # (tT, L)

    acc = jnp.dot(align, xh_ref[0], preferred_element_type=jnp.float32)
    acc = acc + jnp.dot(align, xm_ref[0], preferred_element_type=jnp.float32)
    acc = acc + jnp.dot(align, xl_ref[0], preferred_element_type=jnp.float32)
    out_ref[0] = acc.astype(out_ref.dtype)                   # (tT, D)


def _pick_t_tile(T, max_tile=256):
    """Largest multiple-of-8 tile <= max_tile that divides T (or T itself)."""
    if T <= max_tile:
        return T
    for t in range(max_tile - max_tile % 8, 7, -8):
        if T % t == 0:
            return t
    return T


# ----------------------------------------------------------------------------
# LengthRegulator.forward (target provided)
# ----------------------------------------------------------------------------
def length_regulator_forward(x, params, target, mel_max_length, *, t_tile=None):
    B, L, D = x.shape
    T = mel_max_length
    K, _, F = params["w1"].shape
    assert K == 3, "kernel fuses exactly kernel_size=3 (FastSpeech default)"

    # fold the 3 conv taps into one contracting dim; bf16 weights for the MXU
    w1f = params["w1"].reshape(K * D, F).astype(jnp.bfloat16)
    w2f = params["w2"].reshape(K * F, F).astype(jnp.bfloat16)

    def _full(shape):
        return pl.BlockSpec(shape, lambda b: (0,) * len(shape))

    # ---------------- duration predictor ----------------
    dur3 = pl.pallas_call(
        _duration_kernel,
        out_shape=jax.ShapeDtypeStruct((B, L, 1), jnp.float32),
        grid_spec=pltpu.PrefetchScalarGridSpec(
            num_scalar_prefetch=0,
            grid=(B,),
            in_specs=[
                pl.BlockSpec((1, L, D), lambda b: (b, 0, 0)),     # x
                _full((K * D, F)), _full((1, F)), _full((1, F)), _full((1, F)),
                _full((K * F, F)), _full((1, F)), _full((1, F)), _full((1, F)),
                _full((1, F)), _full((1, 1)),
            ],
            out_specs=pl.BlockSpec((1, L, 1), lambda b: (b, 0, 0)),
        ),
        compiler_params=pltpu.CompilerParams(
            dimension_semantics=("parallel",)),
    )(x, w1f, params["b1"], params["g1"], params["be1"],
      w2f, params["b2"], params["g2"], params["be2"],
      params["wl"], params["bl"])
    dur_pred = dur3[:, :, 0]            # (B, L) -- matches `.squeeze()` (training)

    # ---------------- length regulation ----------------
    # duration cumsums in the wrapper (int32; no tri-matrix / M=1 matmul in-kernel)
    dur_i = target.astype(jnp.int32)
    end = jnp.cumsum(dur_i, axis=-1)                  # inclusive
    start = end - dur_i                               # exclusive
    bounds = jnp.stack([start, end], axis=1)          # (B, 2, L) int32
    # NOTE: frames beyond sum(target) are zero (padding); assumes sum <= mel_max.

    # 3-way bf16 split of x: x == hi + mid + lo exactly in f32, so the bf16
    # MXU passes reproduce the f32 row copies bit-exactly.
    x_f32 = x.astype(jnp.float32)
    x_hi = x_f32.astype(jnp.bfloat16)
    r1 = x_f32 - x_hi.astype(jnp.float32)
    x_mid = r1.astype(jnp.bfloat16)
    x_lo = (r1 - x_mid.astype(jnp.float32)).astype(jnp.bfloat16)

    tT = t_tile if t_tile is not None else _pick_t_tile(T)
    assert T % tT == 0, "mel_max_length must be divisible by the T tile"

    out = pl.pallas_call(
        _regulate_kernel,
        out_shape=jax.ShapeDtypeStruct((B, T, D), x.dtype),
        grid_spec=pltpu.PrefetchScalarGridSpec(
            num_scalar_prefetch=0,
            grid=(B, T // tT),
            in_specs=[
                pl.BlockSpec((1, 2, L), lambda b, t: (b, 0, 0)),  # cumsum bounds
                pl.BlockSpec((1, L, D), lambda b, t: (b, 0, 0)),  # x_hi (resident over t)
                pl.BlockSpec((1, L, D), lambda b, t: (b, 0, 0)),  # x_mid
                pl.BlockSpec((1, L, D), lambda b, t: (b, 0, 0)),  # x_lo
            ],
            out_specs=pl.BlockSpec((1, tT, D), lambda b, t: (b, t, 0)),
        ),
        compiler_params=pltpu.CompilerParams(
            dimension_semantics=("parallel", "parallel")),
    )(bounds, x_hi, x_mid, x_lo)

    return out, dur_pred


def make_params(key, encoder_dim, filter_size, kernel):
    ks = jax.random.split(key, 3)
    scale1 = (6.0 / (encoder_dim + filter_size)) ** 0.5   # xavier_uniform, gain=1
    scale2 = (6.0 / (filter_size + filter_size)) ** 0.5
    scale3 = (6.0 / (filter_size + 1)) ** 0.5
    return {
        # conv weights stored as (k, in, out) — PyTorch Conv1d is (out, in, k),
        # transpose accordingly when loading real checkpoints.
        "w1": jax.random.uniform(ks[0], (kernel, encoder_dim, filter_size),
                                 jnp.float32, -scale1, scale1),
        "b1": jnp.zeros((1, filter_size), jnp.float32),
        "g1": jnp.ones((1, filter_size), jnp.float32),
        "be1": jnp.zeros((1, filter_size), jnp.float32),
        "w2": jax.random.uniform(ks[1], (kernel, filter_size, filter_size),
                                 jnp.float32, -scale2, scale2),
        "b2": jnp.zeros((1, filter_size), jnp.float32),
        "g2": jnp.ones((1, filter_size), jnp.float32),
        "be2": jnp.zeros((1, filter_size), jnp.float32),
        # Linear(F, 1): PyTorch weight is (1, F) — kept as a row for the VPU path
        "wl": jax.random.uniform(ks[2], (1, filter_size),
                                 jnp.float32, -scale3, scale3),
        "bl": jnp.zeros((1, 1), jnp.float32),
    }


if __name__ == "__main__":
    B, L, D = 2, 8, 32          # batch, phoneme sequence length, encoder_dim
    FILTER, KERNEL = 32, 3      # duration_predictor_filter_size / kernel_size
    MEL_MAX = 32                # mel_max_length

    key = jax.random.PRNGKey(0)
    kx, kd, kp = jax.random.split(key, 3)
    x = jax.random.normal(kx, (B, L, D), jnp.float32)
    target = jax.random.randint(kd, (B, L), 1, 5, jnp.int32)   # durations in [1,4]
    params = make_params(kp, D, FILTER, KERNEL)

    fwd = jax.jit(functools.partial(length_regulator_forward,
                                    mel_max_length=MEL_MAX))
    output, dur_pred = fwd(x, params, target)
    jax.block_until_ready((output, dur_pred))

    assert output.shape == (B, MEL_MAX, D)
    assert dur_pred.shape == (B, L)
    print("KERNEL_OK")
</pallas_src>

<mosaic_0001>
module attributes {stable_mosaic.version = 11 : i64} {
  func.func @_duration_kernel(%arg0: i32, %arg1: memref<1x8x32xf32, #tpu.memory_space<vmem>>, %arg2: memref<96x32xbf16, #tpu.memory_space<vmem>>, %arg3: memref<1x32xf32, #tpu.memory_space<vmem>>, %arg4: memref<1x32xf32, #tpu.memory_space<vmem>>, %arg5: memref<1x32xf32, #tpu.memory_space<vmem>>, %arg6: memref<96x32xbf16, #tpu.memory_space<vmem>>, %arg7: memref<1x32xf32, #tpu.memory_space<vmem>>, %arg8: memref<1x32xf32, #tpu.memory_space<vmem>>, %arg9: memref<1x32xf32, #tpu.memory_space<vmem>>, %arg10: memref<1x32xf32, #tpu.memory_space<vmem>>, %arg11: memref<1x1xf32, #tpu.memory_space<vmem>>, %arg12: memref<1x8x1xf32, #tpu.memory_space<vmem>>) attributes {dimension_semantics = [#tpu.dimension_semantics<parallel>], iteration_bounds = array<i64: 2>, scalar_prefetch = 0 : i64, scratch_operands = 0 : i64, tpu.core_type = #tpu.core_type<tc>, window_params = [{transform_indices = @transform_0, window_bounds = array<i64: 1, 8, 32>}, {pipeline_mode = #tpu.pipeline_mode<synchronous>, transform_indices = @transform_1, window_bounds = array<i64: 96, 32>}, {pipeline_mode = #tpu.pipeline_mode<synchronous>, transform_indices = @transform_2, window_bounds = array<i64: 1, 32>}, {pipeline_mode = #tpu.pipeline_mode<synchronous>, transform_indices = @transform_3, window_bounds = array<i64: 1, 32>}, {pipeline_mode = #tpu.pipeline_mode<synchronous>, transform_indices = @transform_4, window_bounds = array<i64: 1, 32>}, {pipeline_mode = #tpu.pipeline_mode<synchronous>, transform_indices = @transform_5, window_bounds = array<i64: 96, 32>}, {pipeline_mode = #tpu.pipeline_mode<synchronous>, transform_indices = @transform_6, window_bounds = array<i64: 1, 32>}, {pipeline_mode = #tpu.pipeline_mode<synchronous>, transform_indices = @transform_7, window_bounds = array<i64: 1, 32>}, {pipeline_mode = #tpu.pipeline_mode<synchronous>, transform_indices = @transform_8, window_bounds = array<i64: 1, 32>}, {pipeline_mode = #tpu.pipeline_mode<synchronous>, transform_indices = @transform_9, window_bounds = array<i64: 1, 32>}, {pipeline_mode = #tpu.pipeline_mode<synchronous>, transform_indices = @transform_10, window_bounds = array<i64: 1, 1>}, {transform_indices = @transform_11, window_bounds = array<i64: 1, 8, 1>}]} {
    %c0 = arith.constant 0 : index
    %c0_0 = arith.constant 0 : index
    %c0_1 = arith.constant 0 : index
    %0 = vector.load %arg1[%c0, %c0_0, %c0_1] : memref<1x8x32xf32, #tpu.memory_space<vmem>>, vector<1x8x32xf32>
    %1 = vector.shape_cast %0 : vector<1x8x32xf32> to vector<8x32xf32>
    %2 = tpu.iota {dimensions = array<i32: 0>} : vector<8x1xi32>
    %c0_i32 = arith.constant 0 : i32
    %3 = vector.broadcast %c0_i32 : i32 to vector<8x1xi32>
    %4 = arith.cmpi ne, %2, %3 : vector<8x1xi32>
    %c7_i32 = arith.constant 7 : i32
    %5 = vector.broadcast %c7_i32 : i32 to vector<8x1xi32>
    %6 = arith.cmpi ne, %2, %5 : vector<8x1xi32>
    %c0_2 = arith.constant 0 : index
    %c0_3 = arith.constant 0 : index
    %7 = vector.load %arg3[%c0_2, %c0_3] : memref<1x32xf32, #tpu.memory_space<vmem>>, vector<1x32xf32>
    %c1_i32 = arith.constant 1 : i32
    %8 = tpu.dynamic_rotate %1 by %c1_i32 dim 0 : vector<8x32xf32>, i32 -> vector<8x32xf32>
    %cst = arith.constant 0.000000e+00 : f32
    %9 = vector.shape_cast %4 : vector<8x1xi1> to vector<8x1xi1>
    %10 = vector.broadcast %9 : vector<8x1xi1> to vector<8x32xi1>
    %11 = vector.broadcast %cst : f32 to vector<8x32xf32>
    %12 = arith.select %10, %8, %11 : vector<8x32xi1>, vector<8x32xf32>
    %13 = arith.truncf %12 : vector<8x32xf32> to vector<8x32xbf16>
    %c7_i32_4 = arith.constant 7 : i32
    %14 = tpu.dynamic_rotate %1 by %c7_i32_4 dim 0 : vector<8x32xf32>, i32 -> vector<8x32xf32>
    %cst_5 = arith.constant 0.000000e+00 : f32
    %15 = vector.shape_cast %6 : vector<8x1xi1> to vector<8x1xi1>
    %16 = vector.broadcast %15 : vector<8x1xi1> to vector<8x32xi1>
    %17 = vector.broadcast %cst_5 : f32 to vector<8x32xf32>
    %18 = arith.select %16, %14, %17 : vector<8x32xi1>, vector<8x32xf32>
    %19 = arith.truncf %18 : vector<8x32xf32> to vector<8x32xbf16>
    %20 = arith.truncf %1 : vector<8x32xf32> to vector<8x32xbf16>
    %21 = tpu.concatenate %13, %20, %19 in 1 : vector<8x32xbf16>, vector<8x32xbf16>, vector<8x32xbf16> -> vector<8x96xbf16>
    %c0_6 = arith.constant 0 : index
    %c0_7 = arith.constant 0 : index
    %22 = vector.load %arg2[%c0_6, %c0_7] : memref<96x32xbf16, #tpu.memory_space<vmem>>, vector<96x32xbf16>
    %cst_8 = arith.constant dense<0.000000e+00> : vector<8x32xf32>
    %23 = tpu.matmul %21, %22, %cst_8 {dimension_numbers = #tpu.dot_dimension_numbers<[1], [0], [0], [1], [0, 0, 1, 1], [], []>} : vector<8x96xbf16>, vector<96x32xbf16>, vector<8x32xf32> -> vector<8x32xf32>
    %24 = vector.broadcast %7 : vector<1x32xf32> to vector<8x32xf32>
    %25 = arith.addf %23, %24 : vector<8x32xf32>
    %c0_9 = arith.constant 0 : index
    %c0_10 = arith.constant 0 : index
    %26 = vector.load %arg4[%c0_9, %c0_10] : memref<1x32xf32, #tpu.memory_space<vmem>>, vector<1x32xf32>
    %c0_11 = arith.constant 0 : index
    %c0_12 = arith.constant 0 : index
    %27 = vector.load %arg5[%c0_11, %c0_12] : memref<1x32xf32, #tpu.memory_space<vmem>>, vector<1x32xf32>
    %cst_13 = arith.constant dense<0.000000e+00> : vector<8xf32>
    %28 = vector.multi_reduction <add>, %25, %cst_13 [1] : vector<8x32xf32> to vector<8xf32>
    %29 = vector.shape_cast %28 : vector<8xf32> to vector<8x1xf32>
    %cst_14 = arith.constant 3.200000e+01 : f32
    %30 = vector.broadcast %cst_14 : f32 to vector<8x1xf32>
    %31 = arith.divf %29, %30 : vector<8x1xf32>
    %32 = vector.broadcast %31 : vector<8x1xf32> to vector<8x32xf32>
    %33 = arith.subf %25, %32 : vector<8x32xf32>
    %34 = arith.mulf %33, %33 : vector<8x32xf32>
    %cst_15 = arith.constant dense<0.000000e+00> : vector<8xf32>
    %35 = vector.multi_reduction <add>, %34, %cst_15 [1] : vector<8x32xf32> to vector<8xf32>
    %36 = vector.shape_cast %35 : vector<8xf32> to vector<8x1xf32>
    %cst_16 = arith.constant 3.200000e+01 : f32
    %37 = vector.broadcast %cst_16 : f32 to vector<8x1xf32>
    %38 = arith.divf %36, %37 : vector<8x1xf32>
    %cst_17 = arith.constant 9.99999974E-6 : f32
    %39 = vector.broadcast %cst_17 : f32 to vector<8x1xf32>
    %40 = arith.addf %38, %39 : vector<8x1xf32>
    %41 = math.rsqrt %40 : vector<8x1xf32>
    %42 = vector.broadcast %41 : vector<8x1xf32> to vector<8x32xf32>
    %43 = arith.mulf %33, %42 : vector<8x32xf32>
    %44 = vector.broadcast %26 : vector<1x32xf32> to vector<8x32xf32>
    %45 = arith.mulf %43, %44 : vector<8x32xf32>
    %46 = vector.broadcast %27 : vector<1x32xf32> to vector<8x32xf32>
    %47 = arith.addf %45, %46 : vector<8x32xf32>
    %cst_18 = arith.constant 0.000000e+00 : f32
    %48 = vector.broadcast %cst_18 : f32 to vector<8x32xf32>
    %49 = arith.maximumf %47, %48 : vector<8x32xf32>
    %c0_19 = arith.constant 0 : index
    %c0_20 = arith.constant 0 : index
    %50 = vector.load %arg7[%c0_19, %c0_20] : memref<1x32xf32, #tpu.memory_space<vmem>>, vector<1x32xf32>
    %c1_i32_21 = arith.constant 1 : i32
    %51 = tpu.dynamic_rotate %49 by %c1_i32_21 dim 0 : vector<8x32xf32>, i32 -> vector<8x32xf32>
    %cst_22 = arith.constant 0.000000e+00 : f32
    %52 = vector.shape_cast %4 : vector<8x1xi1> to vector<8x1xi1>
    %53 = vector.broadcast %52 : vector<8x1xi1> to vector<8x32xi1>
    %54 = vector.broadcast %cst_22 : f32 to vector<8x32xf32>
    %55 = arith.select %53, %51, %54 : vector<8x32xi1>, vector<8x32xf32>
    %56 = arith.truncf %55 : vector<8x32xf32> to vector<8x32xbf16>
    %c7_i32_23 = arith.constant 7 : i32
    %57 = tpu.dynamic_rotate %49 by %c7_i32_23 dim 0 : vector<8x32xf32>, i32 -> vector<8x32xf32>
    %cst_24 = arith.constant 0.000000e+00 : f32
    %58 = vector.shape_cast %6 : vector<8x1xi1> to vector<8x1xi1>
    %59 = vector.broadcast %58 : vector<8x1xi1> to vector<8x32xi1>
    %60 = vector.broadcast %cst_24 : f32 to vector<8x32xf32>
    %61 = arith.select %59, %57, %60 : vector<8x32xi1>, vector<8x32xf32>
    %62 = arith.truncf %61 : vector<8x32xf32> to vector<8x32xbf16>
    %63 = arith.truncf %49 : vector<8x32xf32> to vector<8x32xbf16>
    %64 = tpu.concatenate %56, %63, %62 in 1 : vector<8x32xbf16>, vector<8x32xbf16>, vector<8x32xbf16> -> vector<8x96xbf16>
    %c0_25 = arith.constant 0 : index
    %c0_26 = arith.constant 0 : index
    %65 = vector.load %arg6[%c0_25, %c0_26] : memref<96x32xbf16, #tpu.memory_space<vmem>>, vector<96x32xbf16>
    %cst_27 = arith.constant dense<0.000000e+00> : vector<8x32xf32>
    %66 = tpu.matmul %64, %65, %cst_27 {dimension_numbers = #tpu.dot_dimension_numbers<[1], [0], [0], [1], [0, 0, 1, 1], [], []>} : vector<8x96xbf16>, vector<96x32xbf16>, vector<8x32xf32> -> vector<8x32xf32>
    %67 = vector.broadcast %50 : vector<1x32xf32> to vector<8x32xf32>
    %68 = arith.addf %66, %67 : vector<8x32xf32>
    %c0_28 = arith.constant 0 : index
    %c0_29 = arith.constant 0 : index
    %69 = vector.load %arg8[%c0_28, %c0_29] : memref<1x32xf32, #tpu.memory_space<vmem>>, vector<1x32xf32>
    %c0_30 = arith.constant 0 : index
    %c0_31 = arith.constant 0 : index
    %70 = vector.load %arg9[%c0_30, %c0_31] : memref<1x32xf32, #tpu.memory_space<vmem>>, vector<1x32xf32>
    %cst_32 = arith.constant dense<0.000000e+00> : vector<8xf32>
    %71 = vector.multi_reduction <add>, %68, %cst_32 [1] : vector<8x32xf32> to vector<8xf32>
    %72 = vector.shape_cast %71 : vector<8xf32> to vector<8x1xf32>
    %cst_33 = arith.constant 3.200000e+01 : f32
    %73 = vector.broadcast %cst_33 : f32 to vector<8x1xf32>
    %74 = arith.divf %72, %73 : vector<8x1xf32>
    %75 = vector.broadcast %74 : vector<8x1xf32> to vector<8x32xf32>
    %76 = arith.subf %68, %75 : vector<8x32xf32>
    %77 = arith.mulf %76, %76 : vector<8x32xf32>
    %cst_34 = arith.constant dense<0.000000e+00> : vector<8xf32>
    %78 = vector.multi_reduction <add>, %77, %cst_34 [1] : vector<8x32xf32> to vector<8xf32>
    %79 = vector.shape_cast %78 : vector<8xf32> to vector<8x1xf32>
    %cst_35 = arith.constant 3.200000e+01 : f32
    %80 = vector.broadcast %cst_35 : f32 to vector<8x1xf32>
    %81 = arith.divf %79, %80 : vector<8x1xf32>
    %cst_36 = arith.constant 9.99999974E-6 : f32
    %82 = vector.broadcast %cst_36 : f32 to vector<8x1xf32>
    %83 = arith.addf %81, %82 : vector<8x1xf32>
    %84 = math.rsqrt %83 : vector<8x1xf32>
    %85 = vector.broadcast %84 : vector<8x1xf32> to vector<8x32xf32>
    %86 = arith.mulf %76, %85 : vector<8x32xf32>
    %87 = vector.broadcast %69 : vector<1x32xf32> to vector<8x32xf32>
    %88 = arith.mulf %86, %87 : vector<8x32xf32>
    %89 = vector.broadcast %70 : vector<1x32xf32> to vector<8x32xf32>
    %90 = arith.addf %88, %89 : vector<8x32xf32>
    %cst_37 = arith.constant 0.000000e+00 : f32
    %91 = vector.broadcast %cst_37 : f32 to vector<8x32xf32>
    %92 = arith.maximumf %90, %91 : vector<8x32xf32>
    %c0_38 = arith.constant 0 : index
    %c0_39 = arith.constant 0 : index
    %93 = vector.load %arg10[%c0_38, %c0_39] : memref<1x32xf32, #tpu.memory_space<vmem>>, vector<1x32xf32>
    %94 = vector.broadcast %93 : vector<1x32xf32> to vector<8x32xf32>
    %95 = arith.mulf %92, %94 : vector<8x32xf32>
    %cst_40 = arith.constant dense<0.000000e+00> : vector<8xf32>
    %96 = vector.multi_reduction <add>, %95, %cst_40 [1] : vector<8x32xf32> to vector<8xf32>
    %97 = vector.shape_cast %96 : vector<8xf32> to vector<8x1xf32>
    %c0_41 = arith.constant 0 : index
    %c0_42 = arith.constant 0 : index
    %98 = vector.load %arg11[%c0_41, %c0_42] : memref<1x1xf32, #tpu.memory_space<vmem>>, vector<1x1xf32>
    %99 = vector.broadcast %98 : vector<1x1xf32> to vector<8x1xf32>
    %100 = arith.addf %97, %99 : vector<8x1xf32>
    %cst_43 = arith.constant 0.000000e+00 : f32
    %101 = vector.broadcast %cst_43 : f32 to vector<8x1xf32>
    %102 = arith.maximumf %100, %101 : vector<8x1xf32>
    %c0_44 = arith.constant 0 : index
    %c0_45 = arith.constant 0 : index
    %c0_46 = arith.constant 0 : index
    %103 = vector.load %arg12[%c0_44, %c0_45, %c0_46] : memref<1x8x1xf32, #tpu.memory_space<vmem>>, vector<1x8x1xf32>
    %104 = vector.shape_cast %103 : vector<1x8x1xf32> to vector<8x1xf32>
    %105 = vector.shape_cast %102 : vector<8x1xf32> to vector<1x8x1xf32>
    tpu.vector_store %arg12[%c0_44, %c0_45, %c0_46], %105 {strides = array<i32>} : memref<1x8x1xf32, #tpu.memory_space<vmem>>, vector<1x8x1xf32>,
    return
  }
  func.func @transform_0(%arg0: i32) -> (i32, i32, i32) {
    %c0_i32 = arith.constant 0 : i32
    %c0_i32_0 = arith.constant 0 : i32
    %c0_i32_1 = arith.constant 0 : i32
    return %arg0, %c0_i32, %c0_i32_0 : i32, i32, i32
  }
  func.func @transform_1(%arg0: i32) -> (i32, i32) {
    %c0_i32 = arith.constant 0 : i32
    %c0_i32_0 = arith.constant 0 : i32
    %c0_i32_1 = arith.constant 0 : i32
    return %c0_i32, %c0_i32_0 : i32, i32
  }
  func.func @transform_2(%arg0: i32) -> (i32, i32) {
    %c0_i32 = arith.constant 0 : i32
    %c0_i32_0 = arith.constant 0 : i32
    %c0_i32_1 = arith.constant 0 : i32
    return %c0_i32, %c0_i32_0 : i32, i32
  }
  func.func @transform_3(%arg0: i32) -> (i32, i32) {
    %c0_i32 = arith.constant 0 : i32
    %c0_i32_0 = arith.constant 0 : i32
    %c0_i32_1 = arith.constant 0 : i32
    return %c0_i32, %c0_i32_0 : i32, i32
  }
  func.func @transform_4(%arg0: i32) -> (i32, i32) {
    %c0_i32 = arith.constant 0 : i32
    %c0_i32_0 = arith.constant 0 : i32
    %c0_i32_1 = arith.constant 0 : i32
    return %c0_i32, %c0_i32_0 : i32, i32
  }
  func.func @transform_5(%arg0: i32) -> (i32, i32) {
    %c0_i32 = arith.constant 0 : i32
    %c0_i32_0 = arith.constant 0 : i32
    %c0_i32_1 = arith.constant 0 : i32
    return %c0_i32, %c0_i32_0 : i32, i32
  }
  func.func @transform_6(%arg0: i32) -> (i32, i32) {
    %c0_i32 = arith.constant 0 : i32
    %c0_i32_0 = arith.constant 0 : i32
    %c0_i32_1 = arith.constant 0 : i32
    return %c0_i32, %c0_i32_0 : i32, i32
  }
  func.func @transform_7(%arg0: i32) -> (i32, i32) {
    %c0_i32 = arith.constant 0 : i32
    %c0_i32_0 = arith.constant 0 : i32
    %c0_i32_1 = arith.constant 0 : i32
    return %c0_i32, %c0_i32_0 : i32, i32
  }
  func.func @transform_8(%arg0: i32) -> (i32, i32) {
    %c0_i32 = arith.constant 0 : i32
    %c0_i32_0 = arith.constant 0 : i32
    %c0_i32_1 = arith.constant 0 : i32
    return %c0_i32, %c0_i32_0 : i32, i32
  }
  func.func @transform_9(%arg0: i32) -> (i32, i32) {
    %c0_i32 = arith.constant 0 : i32
    %c0_i32_0 = arith.constant 0 : i32
    %c0_i32_1 = arith.constant 0 : i32
    return %c0_i32, %c0_i32_0 : i32, i32
  }
  func.func @transform_10(%arg0: i32) -> (i32, i32) {
    %c0_i32 = arith.constant 0 : i32
    %c0_i32_0 = arith.constant 0 : i32
    %c0_i32_1 = arith.constant 0 : i32
    return %c0_i32, %c0_i32_0 : i32, i32
  }
  func.func @transform_11(%arg0: i32) -> (i32, i32, i32) {
    %c0_i32 = arith.constant 0 : i32
    %c0_i32_0 = arith.constant 0 : i32
    %c0_i32_1 = arith.constant 0 : i32
    return %arg0, %c0_i32, %c0_i32_0 : i32, i32, i32
  }
}

module attributes {stable_mosaic.version = 11 : i64} {
  func.func @_regulate_kernel(%arg0: i32, %arg1: i32, %arg2: memref<1x2x8xi32, #tpu.memory_space<vmem>>, %arg3: memref<1x8x32xbf16, #tpu.memory_space<vmem>>, %arg4: memref<1x8x32xbf16, #tpu.memory_space<vmem>>, %arg5: memref<1x8x32xbf16, #tpu.memory_space<vmem>>, %arg6: memref<1x32x32xf32, #tpu.memory_space<vmem>>) attributes {dimension_semantics = [#tpu.dimension_semantics<parallel>, #tpu.dimension_semantics<parallel>], iteration_bounds = array<i64: 2, 1>, scalar_prefetch = 0 : i64, scratch_operands = 0 : i64, tpu.core_type = #tpu.core_type<tc>, window_params = [{transform_indices = @transform_0, window_bounds = array<i64: 1, 2, 8>}, {transform_indices = @transform_1, window_bounds = array<i64: 1, 8, 32>}, {transform_indices = @transform_2, window_bounds = array<i64: 1, 8, 32>}, {transform_indices = @transform_3, window_bounds = array<i64: 1, 8, 32>}, {transform_indices = @transform_4, window_bounds = array<i64: 1, 32, 32>}]} {
    %c32_i32 = arith.constant 32 : i32
    %0 = arith.muli %arg1, %c32_i32 : i32
    %c0 = arith.constant 0 : index
    %c0_0 = arith.constant 0 : index
    %c0_1 = arith.constant 0 : index
    %1 = vector.load %arg2[%c0, %c0_0, %c0_1] : memref<1x2x8xi32, #tpu.memory_space<vmem>>, vector<1x2x8xi32>
    %2 = vector.shape_cast %1 : vector<1x2x8xi32> to vector<2x8xi32>
    %3 = vector.extract_strided_slice %2 {offsets = [0, 0], sizes = [1, 8], strides = [1, 1]} : vector<2x8xi32> to vector<1x8xi32>
    %4 = vector.extract_strided_slice %2 {offsets = [1, 0], sizes = [1, 8], strides = [1, 1]} : vector<2x8xi32> to vector<1x8xi32>
    %5 = tpu.iota {dimensions = array<i32: 0>} : vector<32x8xi32>
    %6 = vector.broadcast %0 : i32 to vector<32x8xi32>
    %7 = arith.addi %6, %5 : vector<32x8xi32>
    %8 = vector.broadcast %3 : vector<1x8xi32> to vector<32x8xi32>
    %9 = arith.cmpi sge, %7, %8 : vector<32x8xi32>
    %10 = vector.broadcast %4 : vector<1x8xi32> to vector<32x8xi32>
    %11 = arith.cmpi slt, %7, %10 : vector<32x8xi32>
    %12 = arith.andi %9, %11 : vector<32x8xi1>
    %13 = arith.extui %12 : vector<32x8xi1> to vector<32x8xi32>
    %14 = arith.sitofp %13 : vector<32x8xi32> to vector<32x8xf32>
    %15 = arith.truncf %14 : vector<32x8xf32> to vector<32x8xbf16>
    %c0_2 = arith.constant 0 : index
    %c0_3 = arith.constant 0 : index
    %c0_4 = arith.constant 0 : index
    %16 = vector.load %arg3[%c0_2, %c0_3, %c0_4] : memref<1x8x32xbf16, #tpu.memory_space<vmem>>, vector<1x8x32xbf16>
    %17 = vector.shape_cast %16 : vector<1x8x32xbf16> to vector<8x32xbf16>
    %cst = arith.constant dense<0.000000e+00> : vector<32x32xf32>
    %18 = tpu.matmul %15, %17, %cst {dimension_numbers = #tpu.dot_dimension_numbers<[1], [0], [0], [1], [0, 0, 1, 1], [], []>} : vector<32x8xbf16>, vector<8x32xbf16>, vector<32x32xf32> -> vector<32x32xf32>
    %c0_5 = arith.constant 0 : index
    %c0_6 = arith.constant 0 : index
    %c0_7 = arith.constant 0 : index
    %19 = vector.load %arg4[%c0_5, %c0_6, %c0_7] : memref<1x8x32xbf16, #tpu.memory_space<vmem>>, vector<1x8x32xbf16>
    %20 = vector.shape_cast %19 : vector<1x8x32xbf16> to vector<8x32xbf16>
    %cst_8 = arith.constant dense<0.000000e+00> : vector<32x32xf32>
    %21 = tpu.matmul %15, %20, %cst_8 {dimension_numbers = #tpu.dot_dimension_numbers<[1], [0], [0], [1], [0, 0, 1, 1], [], []>} : vector<32x8xbf16>, vector<8x32xbf16>, vector<32x32xf32> -> vector<32x32xf32>
    %22 = arith.addf %18, %21 : vector<32x32xf32>
    %c0_9 = arith.constant 0 : index
    %c0_10 = arith.constant 0 : index
    %c0_11 = arith.constant 0 : index
    %23 = vector.load %arg5[%c0_9, %c0_10, %c0_11] : memref<1x8x32xbf16, #tpu.memory_space<vmem>>, vector<1x8x32xbf16>
    %24 = vector.shape_cast %23 : vector<1x8x32xbf16> to vector<8x32xbf16>
    %cst_12 = arith.constant dense<0.000000e+00> : vector<32x32xf32>
    %25 = tpu.matmul %15, %24, %cst_12 {dimension_numbers = #tpu.dot_dimension_numbers<[1], [0], [0], [1], [0, 0, 1, 1], [], []>} : vector<32x8xbf16>, vector<8x32xbf16>, vector<32x32xf32> -> vector<32x32xf32>
    %26 = arith.addf %22, %25 : vector<32x32xf32>
    %c0_13 = arith.constant 0 : index
    %c0_14 = arith.constant 0 : index
    %c0_15 = arith.constant 0 : index
    %27 = vector.load %arg6[%c0_13, %c0_14, %c0_15] : memref<1x32x32xf32, #tpu.memory_space<vmem>>, vector<1x32x32xf32>
    %28 = vector.shape_cast %27 : vector<1x32x32xf32> to vector<32x32xf32>
    %29 = vector.shape_cast %26 : vector<32x32xf32> to vector<1x32x32xf32>
    tpu.vector_store %arg6[%c0_13, %c0_14, %c0_15], %29 {strides = array<i32>} : memref<1x32x32xf32, #tpu.memory_space<vmem>>, vector<1x32x32xf32>,
    return
  }
  func.func @transform_0(%arg0: i32, %arg1: i32) -> (i32, i32, i32) {
    %c0_i32 = arith.constant 0 : i32
    %c0_i32_0 = arith.constant 0 : i32
    %c0_i32_1 = arith.constant 0 : i32
    return %arg0, %c0_i32, %c0_i32_0 : i32, i32, i32
  }
  func.func @transform_1(%arg0: i32, %arg1: i32) -> (i32, i32, i32) {
    %c0_i32 = arith.constant 0 : i32
    %c0_i32_0 = arith.constant 0 : i32
    %c0_i32_1 = arith.constant 0 : i32
    return %arg0, %c0_i32, %c0_i32_0 : i32, i32, i32
  }
  func.func @transform_2(%arg0: i32, %arg1: i32) -> (i32, i32, i32) {
    %c0_i32 = arith.constant 0 : i32
    %c0_i32_0 = arith.constant 0 : i32
    %c0_i32_1 = arith.constant 0 : i32
    return %arg0, %c0_i32, %c0_i32_0 : i32, i32, i32
  }
  func.func @transform_3(%arg0: i32, %arg1: i32) -> (i32, i32, i32) {
    %c0_i32 = arith.constant 0 : i32
    %c0_i32_0 = arith.constant 0 : i32
    %c0_i32_1 = arith.constant 0 : i32
    return %arg0, %c0_i32, %c0_i32_0 : i32, i32, i32
  }
  func.func @transform_4(%arg0: i32, %arg1: i32) -> (i32, i32, i32) {
    %c0_i32 = arith.constant 0 : i32
    %c0_i32_0 = arith.constant 0 : i32
    return %arg0, %arg1, %c0_i32 : i32, i32, i32
  }
}

</mosaic_0001>

<llo_original>
// kernel: sub.3
$region0: #{sub.3}
  #allocation0 [shape = 's32[1]{0}', space=sflag, size = 0x4, scoped, tag = 'scoped memory for sub.3']
  %s0 = inlined_call_operand.vmem [shape: s32[2,8], index: 0, kind: input, shape index: {}]
  %s1 = inlined_call_operand.vmem [shape: s32[2,8], index: 1, kind: input, shape index: {}]
  %s2 = inlined_call_operand.vmem [shape: s32[2,8], index: 2, kind: output, shape index: {}]
  %v3 = vld [vmem:[%s0] sm:$0x3]
  %v4 = vld [vmem:[%s1] sm:$0x3]
  %5 = xla_tuple %v3, %v4
  %6 = xla_tuple %5
  %v7 = vsub.s32 %v3, %v4
  %8 = xla_tuple %v7
  %9 = vst [vmem:[%s2] sm:$0x3] %v7

// kernel: length_regulator_forward.3
$region0: #{length_regulator_forward.3}
  #allocation0 [shape = 'u32[]', space=smem, size = 0x4, offset = 0x4, fixed_abs, tag = 'smem constant byte address 0x4 - core index']
  #allocation1 [shape = 'u32[144,128]{1,0:T(1,128)}', space=vmem, size = 0x12000, scoped, tag = 'internal scratch']
  %s0 = inlined_call_operand.vmem [shape: s32[2,2,8], index: 0, kind: input, shape index: {}]
  %s1 = inlined_call_operand.vmem [shape: bf16[2,8,32], index: 1, kind: input, shape index: {}]
  %s2 = inlined_call_operand.vmem [shape: bf16[2,8,32], index: 2, kind: input, shape index: {}]
  %s3 = inlined_call_operand.vmem [shape: bf16[2,8,32], index: 3, kind: input, shape index: {}]
  %s4 = inlined_call_operand.hbm [shape: f32[2,32,32], index: 4, kind: output, shape index: {}]
  %s5 = sld [smem:[#allocation0]]
  $region49: #{length_regulator_forward.3} parent=0
    _
  %s7 = ssub.s32 1, %s5
  %s8 = scalar_select 0, %s7, %s5
  $region1: #{length_regulator_forward.3} parent=0
    #allocation2 [shape = 'u8[32768]{0}', space=vmem, size = 0x8000, scoped, tag = 'output window, operand 0']
    #allocation3 [shape = 's32[2]{0}', space=sflag, size = 0x8, scoped, tag = 'scoped memory for length_regulator_forward.3']
    %9 = vsyncpa [#allocation3], 0
    %s10 = scalar_lea.sflag [#allocation3], 1
    %11 = vsyncpa %s10, 0
    loop: start=0, step=1, limit=4
    $region2: #{length_regulator_forward.3} parent=1 // loop_pre_header
      _
    $region3: #{length_regulator_forward.3} parent=1 // loop_header
      %s13 = sphi 0, %s17
      %p14 = scmp.ge.s32.totalorder %s13, 4
      %s20 = sphi 0, %s32
      %s21 = sphi 0, %s28
      %s22 = sphi 0, %s20
      %s23 = sphi 0, %s21
      %s24 = sphi 0, %s22
      %s25 = sphi 0, %s23
      %s35 = sphi 0, %s37
      %s38 = sphi 0, %s35
      %s39 = sphi 0, %s38
      %s55 = sphi 0, %s39
      %s61 = sphi 0, %s63
      %s64 = sphi 0, %s61
      %s65 = sphi 0, %s64
      %s81 = sphi 0, %s65
      %s87 = sphi 0, %s89
      %s90 = sphi 0, %s87
      %s91 = sphi 0, %s90
      %s107 = sphi 0, %s91
      %s113 = sphi 0, %s115
      %s116 = sphi 0, %s113
      %s117 = sphi 0, %s116
      %s133 = sphi 0, %s117
      %s141 = sphi 0, %s143
      %s144 = sphi 0, %s141
      %s145 = sphi 0, %s144
      %s161 = sphi 0, %s145
    $region4: #{length_regulator_forward.3} parent=1 // loop_header_branch
      %16 = sbr.rel (%p14) target = $region8
    $region5: #{length_regulator_forward.3} parent=1 // loop_body
      %s18 = ssub.s32 %s13, 1
      %s19 = ssub.s32 %s13, 2
      %s26 = sadd.s32 1, %s21
      %p27 = scmp.ge.s32.totalorder %s26, 1
      %s28 = scalar_select %p27, 0, %s26
      %s29 = sadd.s32 1, %s20
      %s30 = scalar_select %p27, %s29, %s20
      %p31 = scmp.ge.s32.totalorder %s30, 2
      %s32 = scalar_select %p31, 0, %s30
      %s33 = ssub.s32 %s20, %s32
      %p34 = scmp.eq.s32.totalorder %s33, 0
      %s36 = sadd.s32 %s35, 1
      %s37 = scalar_select %p34, %s35, %s36
      %p40 = pneg %p34
      %p41 = scmp.eq.s32.totalorder %s13, 1
      %p42 = por %p40, %p41
      %p43 = scmp.ne.s32.totalorder %s35, %s38
      %p44 = scmp.eq.s32.totalorder %s13, 0
      %p45 = por %p43, %p44
      %p46 = scmp.ne.s32.totalorder %s35, %s38
      %p47 = scmp.eq.s32.totalorder %s18, 1
      %p48 = por %p46, %p47
      %p49 = scmp.ne.s32.totalorder %s38, %s39
      %p50 = scmp.eq.s32.totalorder %s18, 0
      %p51 = por %p49, %p50
      %p52 = scmp.ne.s32.totalorder %s38, %s39
      %p53 = scmp.eq.s32.totalorder %s19, 1
      %p54 = por %p52, %p53
      %p56 = scmp.ne.s32.totalorder %s39, %s55
      %p57 = scmp.eq.s32.totalorder %s19, 0
      %p58 = por %p56, %p57
      %s59 = ssub.s32 %s20, %s32
      %p60 = scmp.eq.s32.totalorder %s59, 0
      %s62 = sadd.s32 %s61, 1
      %s63 = scalar_select %p60, %s61, %s62
      %p66 = pneg %p60
      %p67 = scmp.eq.s32.totalorder %s13, 1
      %p68 = por %p66, %p67
      %p69 = scmp.ne.s32.totalorder %s61, %s64
      %p70 = scmp.eq.s32.totalorder %s13, 0
      %p71 = por %p69, %p70
      %p72 = scmp.ne.s32.totalorder %s61, %s64
      %p73 = scmp.eq.s32.totalorder %s18, 1
      %p74 = por %p72, %p73
      %p75 = scmp.ne.s32.totalorder %s64, %s65
      %p76 = scmp.eq.s32.totalorder %s18, 0
      %p77 = por %p75, %p76
      %p78 = scmp.ne.s32.totalorder %s64, %s65
      %p79 = scmp.eq.s32.totalorder %s19, 1
      %p80 = por %p78, %p79
      %p82 = scmp.ne.s32.totalorder %s65, %s81
      %p83 = scmp.eq.s32.totalorder %s19, 0
      %p84 = por %p82, %p83
      %s85 = ssub.s32 %s20, %s32
      %p86 = scmp.eq.s32.totalorder %s85, 0
      %s88 = sadd.s32 %s87, 1
      %s89 = scalar_select %p86, %s87, %s88
      %p92 = pneg %p86
      %p93 = scmp.eq.s32.totalorder %s13, 1
      %p94 = por %p92, %p93
      %p95 = scmp.ne.s32.totalorder %s87, %s90
      %p96 = scmp.eq.s32.totalorder %s13, 0
      %p97 = por %p95, %p96
      %p98 = scmp.ne.s32.totalorder %s87, %s90
      %p99 = scmp.eq.s32.totalorder %s18, 1
      %p100 = por %p98, %p99
      %p101 = scmp.ne.s32.totalorder %s90, %s91
      %p102 = scmp.eq.s32.totalorder %s18, 0
      %p103 = por %p101, %p102
      %p104 = scmp.ne.s32.totalorder %s90, %s91
      %p105 = scmp.eq.s32.totalorder %s19, 1
      %p106 = por %p104, %p105
      %p108 = scmp.ne.s32.totalorder %s91, %s107
      %p109 = scmp.eq.s32.totalorder %s19, 0
      %p110 = por %p108, %p109
      %s111 = ssub.s32 %s20, %s32
      %p112 = scmp.eq.s32.totalorder %s111, 0
      %s114 = sadd.s32 %s113, 1
      %s115 = scalar_select %p112, %s113, %s114
      %p118 = pneg %p112
      %p119 = scmp.eq.s32.totalorder %s13, 1
      %p120 = por %p118, %p119
      %p121 = scmp.ne.s32.totalorder %s113, %s116
      %p122 = scmp.eq.s32.totalorder %s13, 0
      %p123 = por %p121, %p122
      %p124 = scmp.ne.s32.totalorder %s113, %s116
      %p125 = scmp.eq.s32.totalorder %s18, 1
      %p126 = por %p124, %p125
      %p127 = scmp.ne.s32.totalorder %s116, %s117
      %p128 = scmp.eq.s32.totalorder %s18, 0
      %p129 = por %p127, %p128
      %p130 = scmp.ne.s32.totalorder %s116, %s117
      %p131 = scmp.eq.s32.totalorder %s19, 1
      %p132 = por %p130, %p131
      %p134 = scmp.ne.s32.totalorder %s117, %s133
      %p135 = scmp.eq.s32.totalorder %s19, 0
      %p136 = por %p134, %p135
      %s137 = ssub.s32 %s20, %s32
      %s138 = ssub.s32 %s21, %s28
      %s139 = sor.u32 %s137, %s138
      %p140 = scmp.eq.s32.totalorder %s139, 0
      %s142 = sadd.s32 %s141, 1
      %s143 = scalar_select %p140, %s141, %s142
      %p146 = pneg %p140
      %p147 = scmp.eq.s32.totalorder %s13, 1
      %p148 = por %p146, %p147
      %p149 = scmp.ne.s32.totalorder %s141, %s144
      %p150 = scmp.eq.s32.totalorder %s13, 0
      %p151 = por %p149, %p150
      %p152 = scmp.ne.s32.totalorder %s141, %s144
      %p153 = scmp.eq.s32.totalorder %s18, 1
      %p154 = por %p152, %p153
      %p155 = scmp.ne.s32.totalorder %s144, %s145
      %p156 = scmp.eq.s32.totalorder %s18, 0
      %p157 = por %p155, %p156
      %p158 = scmp.ne.s32.totalorder %s144, %s145
      %p159 = scmp.eq.s32.totalorder %s19, 1
      %p160 = por %p158, %p159
      %p162 = scmp.ne.s32.totalorder %s145, %s161
      %p163 = scmp.eq.s32.totalorder %s19, 0
      %p164 = por %p162, %p163
      %p165 = scmp.le.s32.totalorder 1, %s13
      %p166 = scmp.lt.s32.totalorder %s13, 3
      %p167 = pnand %p165, %p166
      %p168 = pneg %p167
      // Predicated region
      $region9: #{length_regulator_forward.3} parent=5 // pred_check
        _
      $region10: #{length_regulator_forward.3} parent=5 // pred_check_branch
        %170 = sbr.rel (%p167) target = $region12
      $region11: #{length_regulator_forward.3} parent=5 // pred_region
        %s171 = ssub.s32 %s13, 1
      $region12: #{length_regulator_forward.3} parent=5 // pred_fallthru
        _
      %p172 = scmp.lt.s32.totalorder %s13, 2
      // Predicated region
      $region13: #{length_regulator_forward.3} parent=5 // pred_check
        %p173 = pneg %p172
      $region14: #{length_regulator_forward.3} parent=5 // pred_check_branch
        %175 = sbr.rel (%p173) target = $region16
      $region15: #{length_regulator_forward.3} parent=5 // pred_region
        // Predicated region
        $region17: #{length_regulator_forward.3} parent=15 // pred_check
          %p176 = pneg %p45
        $region18: #{length_regulator_forward.3} parent=15 // pred_check_branch
          %178 = sbr.rel (%p176) target = $region20
        $region19: #{length_regulator_forward.3} parent=15 // pred_region
          %p179 = scmp.lt.s32.totalorder %s20, 1
          %s180 = scalar_select %p179, %s20, 1
          %s181 = smul.addr %s180, 2
          %s182 = scalar_lea.vmem %s0, %s181
        $region20: #{length_regulator_forward.3} parent=15 // pred_fallthru
          _
        // Predicated region
        $region21: #{length_regulator_forward.3} parent=15 // pred_check
          %p183 = pneg %p71
        $region22: #{length_regulator_forward.3} parent=15 // pred_check_branch
          %185 = sbr.rel (%p183) target = $region24
        $region23: #{length_regulator_forward.3} parent=15 // pred_region
          %p186 = scmp.lt.s32.totalorder %s20, 1
          %s187 = scalar_select %p186, %s20, 1
          %s188 = smul.addr %s187, 4
          %s189 = scalar_lea.vmem %s1, %s188
        $region24: #{length_regulator_forward.3} parent=15 // pred_fallthru
          _
        // Predicated region
        $region25: #{length_regulator_forward.3} parent=15 // pred_check
          %p190 = pneg %p97
        $region26: #{length_regulator_forward.3} parent=15 // pred_check_branch
          %192 = sbr.rel (%p190) target = $region28
        $region27: #{length_regulator_forward.3} parent=15 // pred_region
          %p193 = scmp.lt.s32.totalorder %s20, 1
          %s194 = scalar_select %p193, %s20, 1
          %s195 = smul.addr %s194, 4
          %s196 = scalar_lea.vmem %s2, %s195
        $region28: #{length_regulator_forward.3} parent=15 // pred_fallthru
          _
        // Predicated region
        $region29: #{length_regulator_forward.3} parent=15 // pred_check
          %p197 = pneg %p123
        $region30: #{length_regulator_forward.3} parent=15 // pred_check_branch
          %199 = sbr.rel (%p197) target = $region32
        $region31: #{length_regulator_forward.3} parent=15 // pred_region
          %p200 = scmp.lt.s32.totalorder %s20, 1
          %s201 = scalar_select %p200, %s20, 1
          %s202 = smul.addr %s201, 4
          %s203 = scalar_lea.vmem %s3, %s202
        $region32: #{length_regulator_forward.3} parent=15 // pred_fallthru
          _
      $region16: #{length_regulator_forward.3} parent=5 // pred_fallthru
        _
      %p204 = scmp.le.s32.totalorder 1, %s13
      %p205 = scmp.lt.s32.totalorder %s13, 3
      %p206 = pnand %p204, %p205
      %p207 = pneg %p206
      // Predicated region
      $region33: #{length_regulator_forward.3} parent=5 // pred_check
        _
      $region34: #{length_regulator_forward.3} parent=5 // pred_check_branch
        %209 = sbr.rel (%p206) target = $region36
      $region35: #{length_regulator_forward.3} parent=5 // pred_region
        %s210 = ssub.s32 %s13, 1
        %p211 = scmp.lt.s32.totalorder %s22, 1
        %s212 = scalar_select %p211, %s22, 1
        %s213 = smul.addr %s212, 2
        %s214 = scalar_lea.vmem %s0, %s213
        %p215 = pneg %p51
        %p216 = pneg %p48
        %p217 = scmp.lt.s32.totalorder %s22, 1
        %s218 = scalar_select %p217, %s22, 1
        %s219 = smul.addr %s218, 4
        %s220 = scalar_lea.vmem %s1, %s219
        %p221 = pneg %p77
        %p222 = pneg %p74
        %p223 = scmp.lt.s32.totalorder %s22, 1
        %s224 = scalar_select %p223, %s22, 1
        %s225 = smul.addr %s224, 4
        %s226 = scalar_lea.vmem %s2, %s225
        %p227 = pneg %p103
        %p228 = pneg %p100
        %p229 = scmp.lt.s32.totalorder %s22, 1
        %s230 = scalar_select %p229, %s22, 1
        %s231 = smul.addr %s230, 4
        %s232 = scalar_lea.vmem %s3, %s231
        %p233 = pneg %p129
        %p234 = pneg %p126
        %p235 = pneg %p157
        %p236 = pneg %p154
        %s237 = sand.u32 %s144, 1
        %s238 = scalar_lea.sflag [#allocation3], %s237
        %s239 = sand.u32 %s144, 1
        %s240 = smul.addr %s239, 32
        %s241 = scalar_lea.vmem [#allocation2], %s240
        %p242 = scmp.lt.s32.totalorder %s22, 1
        %s243 = scalar_select %p242, %s22, 1
        %s244 = smul.addr %s243, 2
        %s245 = scalar_lea.vmem %s0, %s244
        %p246 = scmp.lt.s32.totalorder %s22, 1
        %s247 = scalar_select %p246, %s22, 1
        %s248 = smul.addr %s247, 4
        %s249 = scalar_lea.vmem %s1, %s248
        %p250 = scmp.lt.s32.totalorder %s22, 1
        %s251 = scalar_select %p250, %s22, 1
        %s252 = smul.addr %s251, 4
        %s253 = scalar_lea.vmem %s2, %s252
        %p254 = scmp.lt.s32.totalorder %s22, 1
        %s255 = scalar_select %p254, %s22, 1
        %s256 = smul.addr %s255, 4
        %s257 = scalar_lea.vmem %s3, %s256
        %s258 = smul.u32 4, %s23
        %s260 = smul.u32 %s23, 32
        %v261 = vld [vmem:[%s245] sm:$0x3]
        %v262 = vlaneseq
        %v263 = vshrl.u32 %v262, 7
        %v264 = vadd.s32 %v263, 8
        %v265 = vadd.s32 %v263, 16
        %v266 = vadd.s32 %v263, 24
        %v267 = vstv %s260
        %v268 = vadd.s32 %v267, %v263
        %v269 = vadd.s32 %v267, %v264
        %v270 = vadd.s32 %v267, %v265
        %v271 = vadd.s32 %v267, %v266
        %v272 = vlaneseq
        %v273 = vshrl.u32 %v272, 7
        %v274 = vsub.s32 0, %v273
        %v275 = vrot.slane %v261, %v274
        %vm276 = vcmp.ge.s32.totalorder %v268, %v275
        %vm277 = vcmp.ge.s32.totalorder %v269, %v275
        %vm278 = vcmp.ge.s32.totalorder %v270, %v275
        %vm279 = vcmp.ge.s32.totalorder %v271, %v275
        %v280 = vlaneseq
        %v281 = vshrl.u32 %v280, 7
        %v282 = vsub.s32 1, %v281
        %v283 = vrot.slane %v261, %v282
        %vm284 = vcmp.lt.s32.totalorder %v268, %v283
        %vm285 = vcmp.lt.s32.totalorder %v269, %v283
        %vm286 = vcmp.lt.s32.totalorder %v270, %v283
        %vm287 = vcmp.lt.s32.totalorder %v271, %v283
        %vm288 = vmand %vm276, %vm284
        %vm289 = vmand %vm277, %vm285
        %vm290 = vmand %vm278, %vm286
        %vm291 = vmand %vm279, %vm287
        %v292 = vsel %vm288, 1, 0
        %v293 = vsel %vm289, 1, 0
        %v294 = vsel %vm290, 1, 0
        %v295 = vsel %vm291, 1, 0
        %v296 = vcvt.s32.f32 %v292
        %v297 = vcvt.s32.f32 %v293
        %v298 = vcvt.s32.f32 %v294
        %v299 = vcvt.s32.f32 %v295
        %v300 = vpack.c.bf16 %v297, %v296
        %v301 = vpack.c.bf16 %v299, %v298
        %v302 = vld [vmem:[%s249] sm:$0xf]
        %v303 = vld [vmem:[%s253] sm:$0xf]
        %vm304 = vcmask 64512
        %v306 = vsel %vm304, %v300, 0
        %v309 = vsel %vm304, %v301, 0
        %vm311 = vcmask 1043456
        %v313 = vsel %vm311, %v303, 0
        %315 = vmatprep.subr.bf16.mxu0 0
        %316 = vmatpush1.bf16.msra.mxu0 0
        %317 = vmatprep.subr.bf16.mxu0 0
        %318 = vmatpush1.bf16.msra.mxu0 0
        %319 = vmatprep.subr.bf16.mxu0 0
        %320 = vmatpush1.bf16.msra.mxu0 0
        %321 = vmatprep.subr.bf16.mxu0 0
        %322 = vmatpush1.bf16.msra.mxu0 0
        %323 = vmatprep.subr.bf16.mxu0 0
        %324 = vmatpush1.bf16.msra.mxu0 0
        %325 = vmatprep.subr.bf16.mxu0 0
        %326 = vmatpush1.bf16.msra.mxu0 0
        %327 = vmatprep.subr.bf16.mxu0 0
        %328 = vmatpush1.bf16.msra.mxu0 0
        %329 = vmatprep.subr.bf16.mxu0 0
        %330 = vmatpush1.bf16.msra.mxu0 %v313
        %331 = vmatprep.subr.bf16.mxu0 0
        %332 = vmatpush2.bf16.msra.mxu0 0
        %333 = vmatprep.subr.bf16.mxu0 0
        %334 = vmatpush2.bf16.msra.mxu0 0
        %335 = vmatprep.subr.bf16.mxu0 0
        %336 = vmatpush2.bf16.msra.mxu0 0
        %337 = vmatprep.subr.bf16.mxu0 0
        %338 = vmatpush2.bf16.msra.mxu0 0
        %339 = vmatprep.subr.bf16.mxu0 0
        %340 = vmatpush2.bf16.msra.mxu0 0
        %341 = vmatprep.subr.bf16.mxu0 0
        %342 = vmatpush2.bf16.msra.mxu0 0
        %343 = vmatprep.subr.bf16.mxu0 0
        %344 = vmatpush2.bf16.msra.mxu0 0
        %345 = vmatprep.subr.bf16.mxu0 0
        %346 = vmatpush2.bf16.msra.mxu0 0
        %347 = vmatprep.mubr.bf16.mxu0 0
        %348 = vmatmul.mubr.bf16.gmra.mxu0 %v306
        %v349 = vpop.f32.mrf.mxu0
        %v350 = vadd.f32 0.0, %v349
        %v351 = vpop.f32.mrf.mxu0
        %v352 = vpop.f32.mrf.mxu0
        %v353 = vadd.f32 0.0, %v352
        %v354 = vpop.f32.mrf.mxu0
        %355 = vmatprep.mubr.bf16.mxu0 0
        %356 = vmatmul.mubr.bf16.gmra.mxu0 %v309
        %v357 = vpop.f32.mrf.mxu0
        %v358 = vadd.f32 0.0, %v357
        %v359 = vpop.f32.mrf.mxu0
        %v360 = vpop.f32.mrf.mxu0
        %v361 = vadd.f32 0.0, %v360
        %v362 = vpop.f32.mrf.mxu0
        %363 = vdwg.mxu0
        %v365 = vsel %vm311, %v302, 0
        %367 = vmatprep.subr.bf16.mxu0 0
        %368 = vmatpush1.bf16.msra.mxu0 0
        %369 = vmatprep.subr.bf16.mxu0 0
        %370 = vmatpush1.bf16.msra.mxu0 0
        %371 = vmatprep.subr.bf16.mxu0 0
        %372 = vmatpush1.bf16.msra.mxu0 0
        %373 = vmatprep.subr.bf16.mxu0 0
        %374 = vmatpush1.bf16.msra.mxu0 0
        %375 = vmatprep.subr.bf16.mxu0 0
        %376 = vmatpush1.bf16.msra.mxu0 0
        %377 = vmatprep.subr.bf16.mxu0 0
        %378 = vmatpush1.bf16.msra.mxu0 0
        %379 = vmatprep.subr.bf16.mxu0 0
        %380 = vmatpush1.bf16.msra.mxu0 0
        %381 = vmatprep.subr.bf16.mxu0 0
        %382 = vmatpush1.bf16.msra.mxu0 %v365
        %383 = vmatprep.subr.bf16.mxu0 0
        %384 = vmatpush2.bf16.msra.mxu0 0
        %385 = vmatprep.subr.bf16.mxu0 0
        %386 = vmatpush2.bf16.msra.mxu0 0
        %387 = vmatprep.subr.bf16.mxu0 0
        %388 = vmatpush2.bf16.msra.mxu0 0
        %389 = vmatprep.subr.bf16.mxu0 0
        %390 = vmatpush2.bf16.msra.mxu0 0
        %391 = vmatprep.subr.bf16.mxu0 0
        %392 = vmatpush2.bf16.msra.mxu0 0
        %393 = vmatprep.subr.bf16.mxu0 0
        %394 = vmatpush2.bf16.msra.mxu0 0
        %395 = vmatprep.subr.bf16.mxu0 0
        %396 = vmatpush2.bf16.msra.mxu0 0
        %397 = vmatprep.subr.bf16.mxu0 0
        %398 = vmatpush2.bf16.msra.mxu0 0
        %399 = vmatprep.mubr.bf16.mxu0 0
        %400 = vmatmul.mubr.bf16.gmra.mxu0 %v306
        %v401 = vpop.f32.mrf.mxu0
        %v402 = vadd.f32 %v350, %v401
        %v403 = vpop.f32.mrf.mxu0
        %v404 = vpop.f32.mrf.mxu0
        %v405 = vadd.f32 %v353, %v404
        %v406 = vpop.f32.mrf.mxu0
        %407 = vmatprep.mubr.bf16.mxu0 0
        %408 = vmatmul.mubr.bf16.gmra.mxu0 %v309
        %v409 = vpop.f32.mrf.mxu0
        %v410 = vadd.f32 %v358, %v409
        %v411 = vpop.f32.mrf.mxu0
        %v412 = vpop.f32.mrf.mxu0
        %v413 = vadd.f32 %v361, %v412
        %v414 = vpop.f32.mrf.mxu0
        %415 = vdwg.mxu0
        %v416 = vld [vmem:[%s257] sm:$0xf]
        %v418 = vsel %vm311, %v416, 0
        %420 = vmatprep.subr.bf16.mxu0 0
        %421 = vmatpush1.bf16.msra.mxu0 0
        %422 = vmatprep.subr.bf16.mxu0 0
        %423 = vmatpush1.bf16.msra.mxu0 0
        %424 = vmatprep.subr.bf16.mxu0 0
        %425 = vmatpush1.bf16.msra.mxu0 0
        %426 = vmatprep.subr.bf16.mxu0 0
        %427 = vmatpush1.bf16.msra.mxu0 0
        %428 = vmatprep.subr.bf16.mxu0 0
        %429 = vmatpush1.bf16.msra.mxu0 0
        %430 = vmatprep.subr.bf16.mxu0 0
        %431 = vmatpush1.bf16.msra.mxu0 0
        %432 = vmatprep.subr.bf16.mxu0 0
        %433 = vmatpush1.bf16.msra.mxu0 0
        %434 = vmatprep.subr.bf16.mxu0 0
        %435 = vmatpush1.bf16.msra.mxu0 %v418
        %436 = vmatprep.subr.bf16.mxu0 0
        %437 = vmatpush2.bf16.msra.mxu0 0
        %438 = vmatprep.subr.bf16.mxu0 0
        %439 = vmatpush2.bf16.msra.mxu0 0
        %440 = vmatprep.subr.bf16.mxu0 0
        %441 = vmatpush2.bf16.msra.mxu0 0
        %442 = vmatprep.subr.bf16.mxu0 0
        %443 = vmatpush2.bf16.msra.mxu0 0
        %444 = vmatprep.subr.bf16.mxu0 0
        %445 = vmatpush2.bf16.msra.mxu0 0
        %446 = vmatprep.subr.bf16.mxu0 0
        %447 = vmatpush2.bf16.msra.mxu0 0
        %448 = vmatprep.subr.bf16.mxu0 0
        %449 = vmatpush2.bf16.msra.mxu0 0
        %450 = vmatprep.subr.bf16.mxu0 0
        %451 = vmatpush2.bf16.msra.mxu0 0
        %452 = vmatprep.mubr.bf16.mxu0 0
        %453 = vmatmul.mubr.bf16.gmra.mxu0 %v306
        %v454 = vpop.f32.mrf.mxu0
        %v455 = vadd.f32 0.0, %v454
        %v456 = vpop.f32.mrf.mxu0
        %v457 = vpop.f32.mrf.mxu0
        %v458 = vadd.f32 0.0, %v457
        %v459 = vpop.f32.mrf.mxu0
        %460 = vmatprep.mubr.bf16.mxu0 0
        %461 = vmatmul.mubr.bf16.gmra.mxu0 %v309
        %v462 = vpop.f32.mrf.mxu0
        %v463 = vadd.f32 0.0, %v462
        %v464 = vpop.f32.mrf.mxu0
        %v465 = vpop.f32.mrf.mxu0
        %v466 = vadd.f32 0.0, %v465
        %v467 = vpop.f32.mrf.mxu0
        %468 = vdwg.mxu0
        %v469 = vadd.f32 %v402, %v455
        %v470 = vadd.f32 %v405, %v458
        %v471 = vadd.f32 %v410, %v463
        %v472 = vadd.f32 %v413, %v466
        %vm473 = vcmask 261120
        %474 = vst.msk [vmem:[%s241] sm:$0xff] %vm473, %v469
        %475 = vst.msk [vmem:[%s241 + $0x8] sm:$0xff] %vm473, %v470
        %476 = vst.msk [vmem:[%s241 + $0x10] sm:$0xff] %vm473, %v471
        %477 = vst.msk [vmem:[%s241 + $0x18] sm:$0xff] %vm473, %v472
        %s478 = sand.u32 %s144, 1
        %s479 = scalar_lea.sflag [#allocation3], %s478
        %s480 = sand.u32 %s144, 1
        %s481 = smul.addr %s480, 32
        %s482 = scalar_lea.vmem [#allocation2], %s481
        // Predicated region
        $region37: #{length_regulator_forward.3} parent=35 // pred_check
          %p483 = pneg %p154
        $region38: #{length_regulator_forward.3} parent=35 // pred_check_branch
          %485 = sbr.rel (%p483) target = $region40
        $region39: #{length_regulator_forward.3} parent=35 // pred_region
          %s486 = smul.u32 4, %s23
          %s488 = ssub.s32 512, 512
          %489 = vsyncadd %s479, %s488
          %s490 = smul.addr %s22, 4
          %s491 = sadd.s32 %s486, %s490
          %s492 = smul.addr %s491, 128
          %s493 = scalar_lea.hbm %s4, %s492
          %s494 = sshll.u32 %s482, 4
          %s495 = int_to_ptr.vmem [resolvable:$true] %s494
          %500 = dma.vmem_to_hbm [thread:$0]  %s495, 512, %s493, %s479, 128, 128, 8
        $region40: #{length_regulator_forward.3} parent=35 // pred_fallthru
          _
      $region36: #{length_regulator_forward.3} parent=5 // pred_fallthru
        _
      %p501 = scmp.le.s32.totalorder 2, %s13
      // Predicated region
      $region41: #{length_regulator_forward.3} parent=5 // pred_check
        %p502 = pneg %p501
      $region42: #{length_regulator_forward.3} parent=5 // pred_check_branch
        %504 = sbr.rel (%p502) target = $region44
      $region43: #{length_regulator_forward.3} parent=5 // pred_region
        %s505 = ssub.s32 %s13, 2
        // Predicated region
        $region45: #{length_regulator_forward.3} parent=43 // pred_check
          %p506 = pneg %p160
        $region46: #{length_regulator_forward.3} parent=43 // pred_check_branch
          %508 = sbr.rel (%p506) target = $region48
        $region47: #{length_regulator_forward.3} parent=43 // pred_region
          %s509 = sand.u32 %s145, 1
          %s510 = scalar_lea.sflag [#allocation3], %s509
          %s511 = sand.u32 %s145, 1
          %s512 = smul.addr %s511, 32
          %s513 = scalar_lea.vmem [#allocation2], %s512
          %514 = dma.done %s510, 512
        $region48: #{length_regulator_forward.3} parent=43 // pred_fallthru
          _
      $region44: #{length_regulator_forward.3} parent=5 // pred_fallthru
        _
    $region6: #{length_regulator_forward.3} parent=1 // loop_footer
      %s17 = sadd.s32 1, %s13
    $region7: #{length_regulator_forward.3} parent=1 // loop_footer_branch
      %12 = sbr.rel target = $region3
    $region8: #{length_regulator_forward.3} parent=1 // loop_exit
      _
    %515 = vsyncpa [#allocation3], 1
    %s516 = scalar_lea.sflag [#allocation3], 1
    %517 = vsyncpa %s516, 1

// kernel: length_regulator_forward.2
$region0: #{length_regulator_forward.2}
  #allocation0 [shape = 'u32[]', space=smem, size = 0x4, offset = 0x4, fixed_abs, tag = 'smem constant byte address 0x4 - core index']
  #allocation1 [shape = 'u32[144,128]{1,0:T(1,128)}', space=vmem, size = 0x12000, scoped, tag = 'internal scratch']
  #allocation2 [shape = 'f32[1,1]{1,0:T(1,128)S(1)}', space=vmem, size = 0x200, scoped, tag = 'scoped memory for length_regulator_forward.2']
  %s0 = inlined_call_operand.vmem [shape: f32[2,8,32], index: 0, kind: input, shape index: {}]
  %s1 = inlined_call_operand.vmem [shape: bf16[96,32], index: 1, kind: input, shape index: {}]
  %s2 = inlined_call_operand.vmem [shape: f32[1,32], index: 2, kind: input, shape index: {}]
  %s3 = inlined_call_operand.vmem [shape: f32[1,32], index: 3, kind: input, shape index: {}]
  %s4 = inlined_call_operand.vmem [shape: f32[1,32], index: 4, kind: input, shape index: {}]
  %s5 = inlined_call_operand.vmem [shape: bf16[96,32], index: 5, kind: input, shape index: {}]
  %s6 = inlined_call_operand.vmem [shape: f32[1,32], index: 6, kind: input, shape index: {}]
  %s7 = inlined_call_operand.vmem [shape: f32[1,32], index: 7, kind: input, shape index: {}]
  %s8 = inlined_call_operand.vmem [shape: f32[1,32], index: 8, kind: input, shape index: {}]
  %s9 = inlined_call_operand.vmem [shape: f32[1,32], index: 9, kind: input, shape index: {}]
  %s10 = inlined_call_operand.<no memory space> [shape: f32[1,1], index: 10, kind: input, shape index: {}]
  %s11 = inlined_call_operand.vmem [shape: f32[2,8,1], index: 11, kind: output, shape index: {}]
  %s12 = sld [smem:[#allocation0]]
  $region77: #{length_regulator_forward.2} parent=0
    _
  %s14 = ssub.s32 1, %s12
  %s15 = scalar_select 0, %s14, %s12
  %v16 = vstv %s10
  %17 = vst [vmem:[#allocation2] sm:$0x1] %v16
  loop: start=0, step=1, limit=4
  $region2: #{length_regulator_forward.2} parent=0 // loop_pre_header
    _
  $region3: #{length_regulator_forward.2} parent=0 // loop_header
    %s19 = sphi 0, %s23
    %p20 = scmp.ge.s32.totalorder %s19, 4
    %s29 = sphi 0, %s31
    %s32 = sphi 0, %s29
    %s33 = sphi 0, %s32
    %s49 = sphi 0, %s33
    %s53 = sphi 0, %s53
    %s55 = sphi 0, %s53
    %s56 = sphi 0, %s55
    %s70 = sphi 0, %s56
    %s74 = sphi 0, %s74
    %s76 = sphi 0, %s74
    %s77 = sphi 0, %s76
    %s91 = sphi 0, %s77
    %s95 = sphi 0, %s95
    %s97 = sphi 0, %s95
    %s98 = sphi 0, %s97
    %s112 = sphi 0, %s98
    %s116 = sphi 0, %s116
    %s118 = sphi 0, %s116
    %s119 = sphi 0, %s118
    %s133 = sphi 0, %s119
    %s137 = sphi 0, %s137
    %s139 = sphi 0, %s137
    %s140 = sphi 0, %s139
    %s154 = sphi 0, %s140
    %s158 = sphi 0, %s158
    %s160 = sphi 0, %s158
    %s161 = sphi 0, %s160
    %s175 = sphi 0, %s161
    %s179 = sphi 0, %s179
    %s181 = sphi 0, %s179
    %s182 = sphi 0, %s181
    %s196 = sphi 0, %s182
    %s200 = sphi 0, %s200
    %s202 = sphi 0, %s200
    %s203 = sphi 0, %s202
    %s217 = sphi 0, %s203
    %s221 = sphi 0, %s221
    %s223 = sphi 0, %s221
    %s224 = sphi 0, %s223
    %s238 = sphi 0, %s224
    %s242 = sphi 0, %s242
    %s244 = sphi 0, %s242
    %s245 = sphi 0, %s244
    %s259 = sphi 0, %s245
    %s265 = sphi 0, %s267
    %s268 = sphi 0, %s265
    %s269 = sphi 0, %s268
    %s285 = sphi 0, %s269
  $region4: #{length_regulator_forward.2} parent=0 // loop_header_branch
    %22 = sbr.rel (%p20) target = $region8
  $region5: #{length_regulator_forward.2} parent=0 // loop_body
    %s24 = ssub.s32 %s19, 1
    %s25 = ssub.s32 %s19, 2
    %s26 = sadd.s32 %s19, 1
    %s27 = ssub.s32 %s19, %s26
    %p28 = scmp.eq.s32.totalorder %s27, 0
    %s30 = sadd.s32 %s29, 1
    %s31 = scalar_select %p28, %s29, %s30
    %p34 = pneg %p28
    %p35 = scmp.eq.s32.totalorder %s19, 1
    %p36 = por %p34, %p35
    %p37 = scmp.ne.s32.totalorder %s29, %s32
    %p38 = scmp.eq.s32.totalorder %s19, 0
    %p39 = por %p37, %p38
    %p40 = scmp.ne.s32.totalorder %s29, %s32
    %p41 = scmp.eq.s32.totalorder %s24, 1
    %p42 = por %p40, %p41
    %p43 = scmp.ne.s32.totalorder %s32, %s33
    %p44 = scmp.eq.s32.totalorder %s24, 0
    %p45 = por %p43, %p44
    %p46 = scmp.ne.s32.totalorder %s32, %s33
    %p47 = scmp.eq.s32.totalorder %s25, 1
    %p48 = por %p46, %p47
    %p50 = scmp.ne.s32.totalorder %s33, %s49
    %p51 = scmp.eq.s32.totalorder %s25, 0
    %p52 = por %p50, %p51
    %s54 = sadd.s32 %s53, 1
    %p57 = scmp.eq.s32.totalorder %s19, 1
    %p58 = scmp.ne.s32.totalorder %s53, %s55
    %p59 = scmp.eq.s32.totalorder %s19, 0
    %p60 = por %p58, %p59
    %p61 = scmp.ne.s32.totalorder %s53, %s55
    %p62 = scmp.eq.s32.totalorder %s24, 1
    %p63 = por %p61, %p62
    %p64 = scmp.ne.s32.totalorder %s55, %s56
    %p65 = scmp.eq.s32.totalorder %s24, 0
    %p66 = por %p64, %p65
    %p67 = scmp.ne.s32.totalorder %s55, %s56
    %p68 = scmp.eq.s32.totalorder %s25, 1
    %p69 = por %p67, %p68
    %p71 = scmp.ne.s32.totalorder %s56, %s70
    %p72 = scmp.eq.s32.totalorder %s25, 0
    %p73 = por %p71, %p72
    %s75 = sadd.s32 %s74, 1
    %p78 = scmp.eq.s32.totalorder %s19, 1
    %p79 = scmp.ne.s32.totalorder %s74, %s76
    %p80 = scmp.eq.s32.totalorder %s19, 0
    %p81 = por %p79, %p80
    %p82 = scmp.ne.s32.totalorder %s74, %s76
    %p83 = scmp.eq.s32.totalorder %s24, 1
    %p84 = por %p82, %p83
    %p85 = scmp.ne.s32.totalorder %s76, %s77
    %p86 = scmp.eq.s32.totalorder %s24, 0
    %p87 = por %p85, %p86
    %p88 = scmp.ne.s32.totalorder %s76, %s77
    %p89 = scmp.eq.s32.totalorder %s25, 1
    %p90 = por %p88, %p89
    %p92 = scmp.ne.s32.totalorder %s77, %s91
    %p93 = scmp.eq.s32.totalorder %s25, 0
    %p94 = por %p92, %p93
    %s96 = sadd.s32 %s95, 1
    %p99 = scmp.eq.s32.totalorder %s19, 1
    %p100 = scmp.ne.s32.totalorder %s95, %s97
    %p101 = scmp.eq.s32.totalorder %s19, 0
    %p102 = por %p100, %p101
    %p103 = scmp.ne.s32.totalorder %s95, %s97
    %p104 = scmp.eq.s32.totalorder %s24, 1
    %p105 = por %p103, %p104
    %p106 = scmp.ne.s32.totalorder %s97, %s98
    %p107 = scmp.eq.s32.totalorder %s24, 0
    %p108 = por %p106, %p107
    %p109 = scmp.ne.s32.totalorder %s97, %s98
    %p110 = scmp.eq.s32.totalorder %s25, 1
    %p111 = por %p109, %p110
    %p113 = scmp.ne.s32.totalorder %s98, %s112
    %p114 = scmp.eq.s32.totalorder %s25, 0
    %p115 = por %p113, %p114
    %s117 = sadd.s32 %s116, 1
    %p120 = scmp.eq.s32.totalorder %s19, 1
    %p121 = scmp.ne.s32.totalorder %s116, %s118
    %p122 = scmp.eq.s32.totalorder %s19, 0
    %p123 = por %p121, %p122
    %p124 = scmp.ne.s32.totalorder %s116, %s118
    %p125 = scmp.eq.s32.totalorder %s24, 1
    %p126 = por %p124, %p125
    %p127 = scmp.ne.s32.totalorder %s118, %s119
    %p128 = scmp.eq.s32.totalorder %s24, 0
    %p129 = por %p127, %p128
    %p130 = scmp.ne.s32.totalorder %s118, %s119
    %p131 = scmp.eq.s32.totalorder %s25, 1
    %p132 = por %p130, %p131
    %p134 = scmp.ne.s32.totalorder %s119, %s133
    %p135 = scmp.eq.s32.totalorder %s25, 0
    %p136 = por %p134, %p135
    %s138 = sadd.s32 %s137, 1
    %p141 = scmp.eq.s32.totalorder %s19, 1
    %p142 = scmp.ne.s32.totalorder %s137, %s139
    %p143 = scmp.eq.s32.totalorder %s19, 0
    %p144 = por %p142, %p143
    %p145 = scmp.ne.s32.totalorder %s137, %s139
    %p146 = scmp.eq.s32.totalorder %s24, 1
    %p147 = por %p145, %p146
    %p148 = scmp.ne.s32.totalorder %s139, %s140
    %p149 = scmp.eq.s32.totalorder %s24, 0
    %p150 = por %p148, %p149
    %p151 = scmp.ne.s32.totalorder %s139, %s140
    %p152 = scmp.eq.s32.totalorder %s25, 1
    %p153 = por %p151, %p152
    %p155 = scmp.ne.s32.totalorder %s140, %s154
    %p156 = scmp.eq.s32.totalorder %s25, 0
    %p157 = por %p155, %p156
    %s159 = sadd.s32 %s158, 1
    %p162 = scmp.eq.s32.totalorder %s19, 1
    %p163 = scmp.ne.s32.totalorder %s158, %s160
    %p164 = scmp.eq.s32.totalorder %s19, 0
    %p165 = por %p163, %p164
    %p166 = scmp.ne.s32.totalorder %s158, %s160
    %p167 = scmp.eq.s32.totalorder %s24, 1
    %p168 = por %p166, %p167
    %p169 = scmp.ne.s32.totalorder %s160, %s161
    %p170 = scmp.eq.s32.totalorder %s24, 0
    %p171 = por %p169, %p170
    %p172 = scmp.ne.s32.totalorder %s160, %s161
    %p173 = scmp.eq.s32.totalorder %s25, 1
    %p174 = por %p172, %p173
    %p176 = scmp.ne.s32.totalorder %s161, %s175
    %p177 = scmp.eq.s32.totalorder %s25, 0
    %p178 = por %p176, %p177
    %s180 = sadd.s32 %s179, 1
    %p183 = scmp.eq.s32.totalorder %s19, 1
    %p184 = scmp.ne.s32.totalorder %s179, %s181
    %p185 = scmp.eq.s32.totalorder %s19, 0
    %p186 = por %p184, %p185
    %p187 = scmp.ne.s32.totalorder %s179, %s181
    %p188 = scmp.eq.s32.totalorder %s24, 1
    %p189 = por %p187, %p188
    %p190 = scmp.ne.s32.totalorder %s181, %s182
    %p191 = scmp.eq.s32.totalorder %s24, 0
    %p192 = por %p190, %p191
    %p193 = scmp.ne.s32.totalorder %s181, %s182
    %p194 = scmp.eq.s32.totalorder %s25, 1
    %p195 = por %p193, %p194
    %p197 = scmp.ne.s32.totalorder %s182, %s196
    %p198 = scmp.eq.s32.totalorder %s25, 0
    %p199 = por %p197, %p198
    %s201 = sadd.s32 %s200, 1
    %p204 = scmp.eq.s32.totalorder %s19, 1
    %p205 = scmp.ne.s32.totalorder %s200, %s202
    %p206 = scmp.eq.s32.totalorder %s19, 0
    %p207 = por %p205, %p206
    %p208 = scmp.ne.s32.totalorder %s200, %s202
    %p209 = scmp.eq.s32.totalorder %s24, 1
    %p210 = por %p208, %p209
    %p211 = scmp.ne.s32.totalorder %s202, %s203
    %p212 = scmp.eq.s32.totalorder %s24, 0
    %p213 = por %p211, %p212
    %p214 = scmp.ne.s32.totalorder %s202, %s203
    %p215 = scmp.eq.s32.totalorder %s25, 1
    %p216 = por %p214, %p215
    %p218 = scmp.ne.s32.totalorder %s203, %s217
    %p219 = scmp.eq.s32.totalorder %s25, 0
    %p220 = por %p218, %p219
    %s222 = sadd.s32 %s221, 1
    %p225 = scmp.eq.s32.totalorder %s19, 1
    %p226 = scmp.ne.s32.totalorder %s221, %s223
    %p227 = scmp.eq.s32.totalorder %s19, 0
    %p228 = por %p226, %p227
    %p229 = scmp.ne.s32.totalorder %s221, %s223
    %p230 = scmp.eq.s32.totalorder %s24, 1
    %p231 = por %p229, %p230
    %p232 = scmp.ne.s32.totalorder %s223, %s224
    %p233 = scmp.eq.s32.totalorder %s24, 0
    %p234 = por %p232, %p233
    %p235 = scmp.ne.s32.totalorder %s223, %s224
    %p236 = scmp.eq.s32.totalorder %s25, 1
    %p237 = por %p235, %p236
    %p239 = scmp.ne.s32.totalorder %s224, %s238
    %p240 = scmp.eq.s32.totalorder %s25, 0
    %p241 = por %p239, %p240
    %s243 = sadd.s32 %s242, 1
    %p246 = scmp.eq.s32.totalorder %s19, 1
    %p247 = scmp.ne.s32.totalorder %s242, %s244
    %p248 = scmp.eq.s32.totalorder %s19, 0
    %p249 = por %p247, %p248
    %p250 = scmp.ne.s32.totalorder %s242, %s244
    %p251 = scmp.eq.s32.totalorder %s24, 1
    %p252 = por %p250, %p251
    %p253 = scmp.ne.s32.totalorder %s244, %s245
    %p254 = scmp.eq.s32.totalorder %s24, 0
    %p255 = por %p253, %p254
    %p256 = scmp.ne.s32.totalorder %s244, %s245
    %p257 = scmp.eq.s32.totalorder %s25, 1
    %p258 = por %p256, %p257
    %p260 = scmp.ne.s32.totalorder %s245, %s259
    %p261 = scmp.eq.s32.totalorder %s25, 0
    %p262 = por %p260, %p261
    %s263 = ssub.s32 %s19, %s26
    %p264 = scmp.eq.s32.totalorder %s263, 0
    %s266 = sadd.s32 %s265, 1
    %s267 = scalar_select %p264, %s265, %s266
    %p270 = pneg %p264
    %p271 = scmp.eq.s32.totalorder %s19, 1
    %p272 = por %p270, %p271
    %p273 = scmp.ne.s32.totalorder %s265, %s268
    %p274 = scmp.eq.s32.totalorder %s19, 0
    %p275 = por %p273, %p274
    %p276 = scmp.ne.s32.totalorder %s265, %s268
    %p277 = scmp.eq.s32.totalorder %s24, 1
    %p278 = por %p276, %p277
    %p279 = scmp.ne.s32.totalorder %s268, %s269
    %p280 = scmp.eq.s32.totalorder %s24, 0
    %p281 = por %p279, %p280
    %p282 = scmp.ne.s32.totalorder %s268, %s269
    %p283 = scmp.eq.s32.totalorder %s25, 1
    %p284 = por %p282, %p283
    %p286 = scmp.ne.s32.totalorder %s269, %s285
    %p287 = scmp.eq.s32.totalorder %s25, 0
    %p288 = por %p286, %p287
    %p289 = scmp.le.s32.totalorder 1, %s19
    %p290 = scmp.lt.s32.totalorder %s19, 3
    %p291 = pnand %p289, %p290
    %p292 = pneg %p291
    // Predicated region
    $region9: #{length_regulator_forward.2} parent=5 // pred_check
      _
    $region10: #{length_regulator_forward.2} parent=5 // pred_check_branch
      %294 = sbr.rel (%p291) target = $region12
    $region11: #{length_regulator_forward.2} parent=5 // pred_region
      %s295 = ssub.s32 %s19, 1
      // Predicated region
      $region13: #{length_regulator_forward.2} parent=11 // pred_check
        %p296 = pneg %p66
      $region14: #{length_regulator_forward.2} parent=11 // pred_check_branch
        %298 = sbr.rel (%p296) target = $region16
      $region15: #{length_regulator_forward.2} parent=11 // pred_region
        _
      $region16: #{length_regulator_forward.2} parent=11 // pred_fallthru
        _
      // Predicated region
      $region17: #{length_regulator_forward.2} parent=11 // pred_check
        %p299 = pneg %p87
      $region18: #{length_regulator_forward.2} parent=11 // pred_check_branch
        %301 = sbr.rel (%p299) target = $region20
      $region19: #{length_regulator_forward.2} parent=11 // pred_region
        _
      $region20: #{length_regulator_forward.2} parent=11 // pred_fallthru
        _
      // Predicated region
      $region21: #{length_regulator_forward.2} parent=11 // pred_check
        %p302 = pneg %p108
      $region22: #{length_regulator_forward.2} parent=11 // pred_check_branch
        %304 = sbr.rel (%p302) target = $region24
      $region23: #{length_regulator_forward.2} parent=11 // pred_region
        _
      $region24: #{length_regulator_forward.2} parent=11 // pred_fallthru
        _
      // Predicated region
      $region25: #{length_regulator_forward.2} parent=11 // pred_check
        %p305 = pneg %p129
      $region26: #{length_regulator_forward.2} parent=11 // pred_check_branch
        %307 = sbr.rel (%p305) target = $region28
      $region27: #{length_regulator_forward.2} parent=11 // pred_region
        _
      $region28: #{length_regulator_forward.2} parent=11 // pred_fallthru
        _
      // Predicated region
      $region29: #{length_regulator_forward.2} parent=11 // pred_check
        %p308 = pneg %p150
      $region30: #{length_regulator_forward.2} parent=11 // pred_check_branch
        %310 = sbr.rel (%p308) target = $region32
      $region31: #{length_regulator_forward.2} parent=11 // pred_region
        _
      $region32: #{length_regulator_forward.2} parent=11 // pred_fallthru
        _
      // Predicated region
      $region33: #{length_regulator_forward.2} parent=11 // pred_check
        %p311 = pneg %p171
      $region34: #{length_regulator_forward.2} parent=11 // pred_check_branch
        %313 = sbr.rel (%p311) target = $region36
      $region35: #{length_regulator_forward.2} parent=11 // pred_region
        _
      $region36: #{length_regulator_forward.2} parent=11 // pred_fallthru
        _
      // Predicated region
      $region37: #{length_regulator_forward.2} parent=11 // pred_check
        %p314 = pneg %p192
      $region38: #{length_regulator_forward.2} parent=11 // pred_check_branch
        %316 = sbr.rel (%p314) target = $region40
      $region39: #{length_regulator_forward.2} parent=11 // pred_region
        _
      $region40: #{length_regulator_forward.2} parent=11 // pred_fallthru
        _
      // Predicated region
      $region41: #{length_regulator_forward.2} parent=11 // pred_check
        %p317 = pneg %p213
      $region42: #{length_regulator_forward.2} parent=11 // pred_check_branch
        %319 = sbr.rel (%p317) target = $region44
      $region43: #{length_regulator_forward.2} parent=11 // pred_region
        _
      $region44: #{length_regulator_forward.2} parent=11 // pred_fallthru
        _
      // Predicated region
      $region45: #{length_regulator_forward.2} parent=11 // pred_check
        %p320 = pneg %p234
      $region46: #{length_regulator_forward.2} parent=11 // pred_check_branch
        %322 = sbr.rel (%p320) target = $region48
      $region47: #{length_regulator_forward.2} parent=11 // pred_region
        _
      $region48: #{length_regulator_forward.2} parent=11 // pred_fallthru
        _
      // Predicated region
      $region49: #{length_regulator_forward.2} parent=11 // pred_check
        %p323 = pneg %p255
      $region50: #{length_regulator_forward.2} parent=11 // pred_check_branch
        %325 = sbr.rel (%p323) target = $region52
      $region51: #{length_regulator_forward.2} parent=11 // pred_region
        _
      $region52: #{length_regulator_forward.2} parent=11 // pred_fallthru
        _
    $region12: #{length_regulator_forward.2} parent=5 // pred_fallthru
      _
    %p326 = scmp.lt.s32.totalorder %s19, 2
    // Predicated region
    $region53: #{length_regulator_forward.2} parent=5 // pred_check
      %p327 = pneg %p326
    $region54: #{length_regulator_forward.2} parent=5 // pred_check_branch
      %329 = sbr.rel (%p327) target = $region56
    $region55: #{length_regulator_forward.2} parent=5 // pred_region
      // Predicated region
      $region57: #{length_regulator_forward.2} parent=55 // pred_check
        %p330 = pneg %p39
      $region58: #{length_regulator_forward.2} parent=55 // pred_check_branch
        %332 = sbr.rel (%p330) target = $region60
      $region59: #{length_regulator_forward.2} parent=55 // pred_region
        %p333 = scmp.lt.s32.totalorder %s19, 1
        %s334 = scalar_select %p333, %s19, 1
        %s335 = smul.addr %s334, 8
        %s336 = scalar_lea.vmem %s0, %s335
      $region60: #{length_regulator_forward.2} parent=55 // pred_fallthru
        _
    $region56: #{length_regulator_forward.2} parent=5 // pred_fallthru
      _
    %p337 = scmp.le.s32.totalorder 1, %s19
    %p338 = scmp.lt.s32.totalorder %s19, 3
    %p339 = pnand %p337, %p338
    %p340 = pneg %p339
    // Predicated region
    $region61: #{length_regulator_forward.2} parent=5 // pred_check
      _
    $region62: #{length_regulator_forward.2} parent=5 // pred_check_branch
      %342 = sbr.rel (%p339) target = $region64
    $region63: #{length_regulator_forward.2} parent=5 // pred_region
      %s343 = ssub.s32 %s19, 1
      %p344 = scmp.lt.s32.totalorder %s24, 1
      %s345 = scalar_select %p344, %s24, 1
      %s346 = smul.addr %s345, 8
      %s347 = scalar_lea.vmem %s0, %s346
      %p348 = pneg %p45
      %p349 = pneg %p42
      %p350 = pneg %p66
      %p351 = pneg %p63
      %p352 = pneg %p87
      %p353 = pneg %p84
      %p354 = pneg %p108
      %p355 = pneg %p105
      %p356 = pneg %p129
      %p357 = pneg %p126
      %p358 = pneg %p150
      %p359 = pneg %p147
      %p360 = pneg %p171
      %p361 = pneg %p168
      %p362 = pneg %p192
      %p363 = pneg %p189
      %p364 = pneg %p213
      %p365 = pneg %p210
      %p366 = pneg %p234
      %p367 = pneg %p231
      %p368 = pneg %p255
      %p369 = pneg %p252
      %p370 = pneg %p281
      %p371 = pneg %p278
      %p372 = scmp.lt.s32.totalorder %s24, 1
      %s373 = scalar_select %p372, %s24, 1
      %s374 = smul.addr %s373, 8
      %s375 = scalar_lea.vmem %s11, %s374
      %p376 = scmp.lt.s32.totalorder %s24, 1
      %s377 = scalar_select %p376, %s24, 1
      %s378 = smul.addr %s377, 8
      %s379 = scalar_lea.vmem %s0, %s378
      %p380 = scmp.lt.s32.totalorder %s24, 1
      %s381 = scalar_select %p380, %s24, 1
      %s382 = smul.addr %s381, 8
      %s383 = scalar_lea.vmem %s11, %s382
      %v385 = vld [vmem:[%s379] sm:$0xff]
      %v386 = vlaneseq
      %v387 = vshrl.u32 %v386, 7
      %vm388 = vcmp.ne.s32.totalorder %v387, 0
      %vm389 = vcmp.ne.s32.totalorder %v387, 7
      %v390 = vld [vmem:[%s2] sm:$0x1]
      %v391 = vrot.slane %v385, 7
      %v392 = vsel %vm388, 1, 0
      %vm393 = vcmp.eq.s32.totalorder %v392, 1
      %v394 = vsel %vm393, %v391, 0.0
      %v395 = vpack.c.bf16 %v394, %v394
      %v396 = vrot.slane %v385, 1
      %v397 = vsel %vm389, 1, 0
      %vm398 = vcmp.eq.s32.totalorder %v397, 1
      %v399 = vsel %vm398, %v396, 0.0
      %v400 = vpack.c.bf16 %v399, %v399
      %v401 = vpack.c.bf16 %v385, %v385
      %403 = vrot.lane.b32.xlu0 %v401, 32
      %v404 = vpop.permute.xlu0 %403
      %406 = vrot.lane.b32.xlu0 %v400, 64
      %v407 = vpop.permute.xlu0 %406
      %vm408 = vcmask 261120
      %v411 = vsel %vm408, %v395, %v404
      %vm412 = vcmask 523264
      %v414 = vsel %vm412, %v411, %v407
      %v415 = vld [vmem:[%s1] sm:$0xf]
      %v416 = vld [vmem:[%s1 + $0x4] sm:$0xf]
      %v417 = vld [vmem:[%s1 + $0x8] sm:$0xf]
      %v418 = vld [vmem:[%s1 + $0xc] sm:$0xf]
      %v419 = vld [vmem:[%s1 + $0x10] sm:$0xf]
      %v420 = vld [vmem:[%s1 + $0x14] sm:$0xf]
      %v421 = vld [vmem:[%s1 + $0x18] sm:$0xf]
      %v422 = vld [vmem:[%s1 + $0x1c] sm:$0xf]
      %v423 = vld [vmem:[%s1 + $0x20] sm:$0xf]
      %v424 = vld [vmem:[%s1 + $0x24] sm:$0xf]
      %v425 = vld [vmem:[%s1 + $0x28] sm:$0xf]
      %v426 = vld [vmem:[%s1 + $0x2c] sm:$0xf]
      %v428 = vlaneseq
      %v429 = vshrl.u32 %v428, 7
      %v430 = vsub.s32 0, %v429
      %v431 = vrot.slane %v390, %v430
      %v445 = vunpack.c.l.b16 %v415
      %v446 = vunpack.c.l.b16 %v416
      %v447 = vunpack.c.l.b16 %v417
      %v448 = vunpack.c.l.b16 %v418
      %v449 = vunpack.c.l.b16 %v419
      %v450 = vunpack.c.l.b16 %v420
      %v451 = vunpack.c.l.b16 %v421
      %v452 = vunpack.c.l.b16 %v422
      %v453 = vunpack.c.l.b16 %v423
      %v454 = vunpack.c.l.b16 %v424
      %v455 = vunpack.c.l.b16 %v425
      %v456 = vunpack.c.l.b16 %v426
      %v457 = vpack.c.b16 %v446, %v445
      %v458 = vpack.c.b16 %v448, %v447
      %v459 = vpack.c.b16 %v450, %v449
      %v460 = vpack.c.b16 %v452, %v451
      %v461 = vpack.c.b16 %v454, %v453
      %v462 = vpack.c.b16 %v456, %v455
      %vm469 = vcmask 785408
      %v470 = vsel %vm469, %v414, 0
      %472 = vmatprep.subr.bf16.mxu0 0
      %473 = vmatpush1.bf16.msra.mxu0 0
      %474 = vmatprep.subr.bf16.mxu0 0
      %475 = vmatpush1.bf16.msra.mxu0 0
      %476 = vmatprep.subr.bf16.mxu0 0
      %477 = vmatpush1.bf16.msra.mxu0 %v462
      %478 = vmatprep.subr.bf16.mxu0 0
      %479 = vmatpush1.bf16.msra.mxu0 %v461
      %480 = vmatprep.subr.bf16.mxu0 0
      %481 = vmatpush1.bf16.msra.mxu0 %v460
      %482 = vmatprep.subr.bf16.mxu0 0
      %483 = vmatpush1.bf16.msra.mxu0 %v459
      %484 = vmatprep.subr.bf16.mxu0 0
      %485 = vmatpush1.bf16.msra.mxu0 %v458
      %486 = vmatprep.subr.bf16.mxu0 0
      %487 = vmatpush1.bf16.msra.mxu0 %v457
      %488 = vmatprep.subr.bf16.mxu0 0
      %489 = vmatpush2.bf16.msra.mxu0 0
      %490 = vmatprep.subr.bf16.mxu0 0
      %491 = vmatpush2.bf16.msra.mxu0 0
      %492 = vmatprep.subr.bf16.mxu0 0
      %493 = vmatpush2.bf16.msra.mxu0 0
      %494 = vmatprep.subr.bf16.mxu0 0
      %495 = vmatpush2.bf16.msra.mxu0 0
      %496 = vmatprep.subr.bf16.mxu0 0
      %497 = vmatpush2.bf16.msra.mxu0 0
      %498 = vmatprep.subr.bf16.mxu0 0
      %499 = vmatpush2.bf16.msra.mxu0 0
      %500 = vmatprep.subr.bf16.mxu0 0
      %501 = vmatpush2.bf16.msra.mxu0 0
      %502 = vmatprep.subr.bf16.mxu0 0
      %503 = vmatpush2.bf16.msra.mxu0 0
      %504 = vmatprep.mubr.bf16.mxu0 0
      %505 = vmatmul.mubr.bf16.gmra.mxu0 %v470
      %v506 = vpop.f32.mrf.mxu0
      %v507 = vadd.f32 %v431, %v506
      %v508 = vpop.f32.mrf.mxu0
      %v509 = vpop.f32.mrf.mxu0
      %v510 = vpop.f32.mrf.mxu0
      %511 = vdwg.mxu0
      %v512 = vld [vmem:[%s3] sm:$0x1]
      %v513 = vld [vmem:[%s4] sm:$0x1]
      %v514 = vsel %vm408, %v507, 0.0
      %515 = vadd.xlane.f32.xlu0 %v514
      %v516 = vpop.xlane.xlu0 %515
      %v517 = vrcp.pop 32.0
      %v518 = vmul.f32 %v516, %v517
      %v519 = vsub.f32 %v507, %v518
      %v520 = vmul.f32 %v519, %v519
      %v521 = vsel %vm408, %v520, 0.0
      %522 = vadd.xlane.f32.xlu0 %v521
      %v523 = vpop.xlane.xlu0 %522
      %v524 = vmul.f32 %v523, %v517
      %v525 = vadd.f32 %v524, 1e-05
      %v526 = vrsqrt.pop %v525
      %v527 = vmul.f32 %v519, %v526
      %v529 = vlaneseq
      %v530 = vshrl.u32 %v529, 7
      %v531 = vsub.s32 0, %v530
      %v532 = vrot.slane %v512, %v531
      %v534 = vmul.f32 %v527, %v532
      %v536 = vlaneseq
      %v537 = vshrl.u32 %v536, 7
      %v538 = vsub.s32 0, %v537
      %v539 = vrot.slane %v513, %v538
      %v541 = vadd.f32 %v534, %v539
      %v542 = vmax.f32 %v541, 0.0
      %v543 = vld [vmem:[%s6] sm:$0x1]
      %v544 = vrot.slane %v542, 7
      %v545 = vsel %vm393, %v544, 0.0
      %v546 = vpack.c.bf16 %v545, %v545
      %v547 = vrot.slane %v542, 1
      %v548 = vsel %vm398, %v547, 0.0
      %v549 = vpack.c.bf16 %v548, %v548
      %v550 = vpack.c.bf16 %v542, %v542
      %552 = vrot.lane.b32.xlu0 %v550, 32
      %v553 = vpop.permute.xlu0 %552
      %555 = vrot.lane.b32.xlu0 %v549, 64
      %v556 = vpop.permute.xlu0 %555
      %v559 = vsel %vm408, %v546, %v553
      %v561 = vsel %vm412, %v559, %v556
      %v562 = vld [vmem:[%s5] sm:$0xf]
      %v563 = vld [vmem:[%s5 + $0x4] sm:$0xf]
      %v564 = vld [vmem:[%s5 + $0x8] sm:$0xf]
      %v565 = vld [vmem:[%s5 + $0xc] sm:$0xf]
      %v566 = vld [vmem:[%s5 + $0x10] sm:$0xf]
      %v567 = vld [vmem:[%s5 + $0x14] sm:$0xf]
      %v568 = vld [vmem:[%s5 + $0x18] sm:$0xf]
      %v569 = vld [vmem:[%s5 + $0x1c] sm:$0xf]
      %v570 = vld [vmem:[%s5 + $0x20] sm:$0xf]
      %v571 = vld [vmem:[%s5 + $0x24] sm:$0xf]
      %v572 = vld [vmem:[%s5 + $0x28] sm:$0xf]
      %v573 = vld [vmem:[%s5 + $0x2c] sm:$0xf]
      %v575 = vlaneseq
      %v576 = vshrl.u32 %v575, 7
      %v577 = vsub.s32 0, %v576
      %v578 = vrot.slane %v543, %v577
      %v592 = vunpack.c.l.b16 %v562
      %v593 = vunpack.c.l.b16 %v563
      %v594 = vunpack.c.l.b16 %v564
      %v595 = vunpack.c.l.b16 %v565
      %v596 = vunpack.c.l.b16 %v566
      %v597 = vunpack.c.l.b16 %v567
      %v598 = vunpack.c.l.b16 %v568
      %v599 = vunpack.c.l.b16 %v569
      %v600 = vunpack.c.l.b16 %v570
      %v601 = vunpack.c.l.b16 %v571
      %v602 = vunpack.c.l.b16 %v572
      %v603 = vunpack.c.l.b16 %v573
      %v604 = vpack.c.b16 %v593, %v592
      %v605 = vpack.c.b16 %v595, %v594
      %v606 = vpack.c.b16 %v597, %v596
      %v607 = vpack.c.b16 %v599, %v598
      %v608 = vpack.c.b16 %v601, %v600
      %v609 = vpack.c.b16 %v603, %v602
      %v616 = vsel %vm469, %v561, 0
      %618 = vmatprep.subr.bf16.mxu0 0
      %619 = vmatpush1.bf16.msra.mxu0 0
      %620 = vmatprep.subr.bf16.mxu0 0
      %621 = vmatpush1.bf16.msra.mxu0 0
      %622 = vmatprep.subr.bf16.mxu0 0
      %623 = vmatpush1.bf16.msra.mxu0 %v609
      %624 = vmatprep.subr.bf16.mxu0 0
      %625 = vmatpush1.bf16.msra.mxu0 %v608
      %626 = vmatprep.subr.bf16.mxu0 0
      %627 = vmatpush1.bf16.msra.mxu0 %v607
      %628 = vmatprep.subr.bf16.mxu0 0
      %629 = vmatpush1.bf16.msra.mxu0 %v606
      %630 = vmatprep.subr.bf16.mxu0 0
      %631 = vmatpush1.bf16.msra.mxu0 %v605
      %632 = vmatprep.subr.bf16.mxu0 0
      %633 = vmatpush1.bf16.msra.mxu0 %v604
      %634 = vmatprep.subr.bf16.mxu0 0
      %635 = vmatpush2.bf16.msra.mxu0 0
      %636 = vmatprep.subr.bf16.mxu0 0
      %637 = vmatpush2.bf16.msra.mxu0 0
      %638 = vmatprep.subr.bf16.mxu0 0
      %639 = vmatpush2.bf16.msra.mxu0 0
      %640 = vmatprep.subr.bf16.mxu0 0
      %641 = vmatpush2.bf16.msra.mxu0 0
      %642 = vmatprep.subr.bf16.mxu0 0
      %643 = vmatpush2.bf16.msra.mxu0 0
      %644 = vmatprep.subr.bf16.mxu0 0
      %645 = vmatpush2.bf16.msra.mxu0 0
      %646 = vmatprep.subr.bf16.mxu0 0
      %647 = vmatpush2.bf16.msra.mxu0 0
      %648 = vmatprep.subr.bf16.mxu0 0
      %649 = vmatpush2.bf16.msra.mxu0 0
      %650 = vmatprep.mubr.bf16.mxu0 0
      %651 = vmatmul.mubr.bf16.gmra.mxu0 %v616
      %v652 = vpop.f32.mrf.mxu0
      %v653 = vadd.f32 %v578, %v652
      %v654 = vpop.f32.mrf.mxu0
      %v655 = vpop.f32.mrf.mxu0
      %v656 = vpop.f32.mrf.mxu0
      %657 = vdwg.mxu0
      %v658 = vld [vmem:[%s7] sm:$0x1]
      %v659 = vld [vmem:[%s8] sm:$0x1]
      %v660 = vsel %vm408, %v653, 0.0
      %661 = vadd.xlane.f32.xlu0 %v660
      %v662 = vpop.xlane.xlu0 %661
      %v663 = vmul.f32 %v662, %v517
      %v664 = vsub.f32 %v653, %v663
      %v665 = vmul.f32 %v664, %v664
      %v666 = vsel %vm408, %v665, 0.0
      %667 = vadd.xlane.f32.xlu0 %v666
      %v668 = vpop.xlane.xlu0 %667
      %v669 = vmul.f32 %v668, %v517
      %v670 = vadd.f32 %v669, 1e-05
      %v671 = vrsqrt.pop %v670
      %v672 = vmul.f32 %v664, %v671
      %v674 = vlaneseq
      %v675 = vshrl.u32 %v674, 7
      %v676 = vsub.s32 0, %v675
      %v677 = vrot.slane %v658, %v676
      %v679 = vmul.f32 %v672, %v677
      %v681 = vlaneseq
      %v682 = vshrl.u32 %v681, 7
      %v683 = vsub.s32 0, %v682
      %v684 = vrot.slane %v659, %v683
      %v686 = vadd.f32 %v679, %v684
      %v687 = vmax.f32 %v686, 0.0
      %v688 = vld [vmem:[%s9] sm:$0x1]
      %v690 = vlaneseq
      %v691 = vshrl.u32 %v690, 7
      %v692 = vsub.s32 0, %v691
      %v693 = vrot.slane %v688, %v692
      %v695 = vmul.f32 %v687, %v693
      %v696 = vsel %vm408, %v695, 0.0
      %697 = vadd.xlane.f32.xlu0 %v696
      %v698 = vpop.xlane.xlu0 %697
      %v699 = vld [vmem:[#allocation2] sm:$0x1]
      %v701 = vlaneseq
      %v702 = vshrl.u32 %v701, 7
      %v703 = vsub.s32 0, %v702
      %v704 = vrot.slane %v699, %v703
      %v706 = vadd.f32 %v698, %v704
      %v707 = vmax.f32 %v706, 0.0
      %vm708 = vcmask 7168
      %709 = vst.msk [vmem:[%s383] sm:$0xff] %vm708, %v707
      %p710 = scmp.lt.s32.totalorder %s24, 1
      %s711 = scalar_select %p710, %s24, 1
      %s712 = smul.addr %s711, 8
      %s713 = scalar_lea.vmem %s11, %s712
      // Predicated region
      $region65: #{length_regulator_forward.2} parent=63 // pred_check
        %p714 = pneg %p278
      $region66: #{length_regulator_forward.2} parent=63 // pred_check_branch
        %716 = sbr.rel (%p714) target = $region68
      $region67: #{length_regulator_forward.2} parent=63 // pred_region
        _
      $region68: #{length_regulator_forward.2} parent=63 // pred_fallthru
        _
    $region64: #{length_regulator_forward.2} parent=5 // pred_fallthru
      _
    %p717 = scmp.le.s32.totalorder 2, %s19
    // Predicated region
    $region69: #{length_regulator_forward.2} parent=5 // pred_check
      %p718 = pneg %p717
    $region70: #{length_regulator_forward.2} parent=5 // pred_check_branch
      %720 = sbr.rel (%p718) target = $region72
    $region71: #{length_regulator_forward.2} parent=5 // pred_region
      %s721 = ssub.s32 %s19, 2
      // Predicated region
      $region73: #{length_regulator_forward.2} parent=71 // pred_check
        %p722 = pneg %p284
      $region74: #{length_regulator_forward.2} parent=71 // pred_check_branch
        %724 = sbr.rel (%p722) target = $region76
      $region75: #{length_regulator_forward.2} parent=71 // pred_region
        %p725 = scmp.lt.s32.totalorder %s25, 1
        %s726 = scalar_select %p725, %s25, 1
        %s727 = smul.addr %s726, 8
        %s728 = scalar_lea.vmem %s11, %s727
      $region76: #{length_regulator_forward.2} parent=71 // pred_fallthru
        _
    $region72: #{length_regulator_forward.2} parent=5 // pred_fallthru
      _
  $region6: #{length_regulator_forward.2} parent=0 // loop_footer
    %s23 = sadd.s32 1, %s19
  $region7: #{length_regulator_forward.2} parent=0 // loop_footer_branch
    %18 = sbr.rel target = $region3
  $region8: #{length_regulator_forward.2} parent=0 // loop_exit
    _

</llo_original>
